<compile_context>
chip_gen: v5e
topology: v5e:2x2
jax: 0.10.0
libtpu: 0.0.40
codegen_flags: <defaults>
</compile_context>

<pallas_src>
import jax
import jax.numpy as jnp
from jax.experimental import pallas as pl
from jax.experimental.pallas import tpu as pltpu

LANE = 128  # lane width / MXU tile alignment


def _round_up(x, m):
    return ((x + m - 1) // m) * m


def _pad_cols(a, n):
    pad = n - a.shape[1]
    return a if pad == 0 else jnp.pad(a, ((0, 0), (0, pad)))


def _pad_rows(a, n):
    pad = n - a.shape[0]
    return a if pad == 0 else jnp.pad(a, ((0, pad), (0, 0)))


def mlp_kernel(x_ref, w1_ref, b1_ref, w2_ref, b2_ref, w3_ref, b3_ref, o_ref):
    # fc1: bf16 MXU operands, f32 accumulate; bias + ReLU in f32.
    h1 = jnp.dot(x_ref[...], w1_ref[...], preferred_element_type=jnp.float32)
    h1 = jnp.maximum(h1 + b1_ref[...], 0.0)
    # dropout: forward/eval semantics -> identity.
    # TODO(synk): training-mode dropout (pltpu.prng_random_bits mask) not implemented.
    # fc2 (output lane-padded to 128; padded columns are exactly zero).
    h2 = jnp.dot(h1.astype(jnp.bfloat16), w2_ref[...],
                 preferred_element_type=jnp.float32)
    h2 = jnp.maximum(h2 + b2_ref[...], 0.0)
    # fc3 (output lane-padded to 128).
    h3 = jnp.dot(h2.astype(jnp.bfloat16), w3_ref[...],
                 preferred_element_type=jnp.float32)
    o_ref[...] = (h3 + b3_ref[...]).astype(o_ref.dtype)   # bf16 store (lane-dense)


def mlp_forward(token_ids, emb_table, w1, b1, w2, b2, w3, b3,
                fix_length, input_size, tm=512):
    B, L = token_ids.shape
    assert L == fix_length
    D = input_size
    K1 = L * D                       # 256
    H1 = w1.shape[1]                 # 512
    H2 = w2.shape[1]                 # 32
    NO = w3.shape[1]                 # 8
    H2p = _round_up(H2, LANE)        # 128
    NOp = _round_up(NO, LANE)        # 128

    # Row tile: multiple of 256 (fills v6e/v7x 256-wide MXU; 2x the v5e tile),
    # capped by the padded batch so tiny batches don't over-pad. For B >= 1024 the
    # grid has >=2 steps so the "parallel" axis can shard across v7x's two TCs.
    tm_eff = min(_round_up(max(tm, 256), 256), _round_up(B, 256))
    Bp = _round_up(B, tm_eff)

    # Pre-kernel glue, streamlined to a single HBM write of the bf16 activation:
    # pad the (tiny) token ids, gather from a bf16 table, free row-major reshape.
    ids_p = jnp.pad(token_ids, ((0, Bp - B), (0, 0)))
    xp = jnp.take(emb_table.astype(jnp.bfloat16), ids_p, axis=0).reshape(Bp, K1)

    # bf16 MXU operands; biases stay f32 for the epilogue.
    w1b = w1.astype(jnp.bfloat16)
    w2b = _pad_cols(w2, H2p).astype(jnp.bfloat16)                 # [512, 128]
    w3b = _pad_cols(_pad_rows(w3, H2p), NOp).astype(jnp.bfloat16)  # [128, 128]
    b2p = _pad_cols(b2, H2p)                                       # [1, 128]
    b3p = _pad_cols(b3, NOp)                                       # [1, 128]

    grid = (Bp // tm_eff,)
    out = pl.pallas_call(
        mlp_kernel,
        out_shape=jax.ShapeDtypeStruct((Bp, NOp), jnp.bfloat16),
        grid_spec=pltpu.PrefetchScalarGridSpec(
            num_scalar_prefetch=0,
            grid=grid,
            in_specs=[
                pl.BlockSpec((tm_eff, K1), lambda i: (i, 0)),   # x tile (pipelined)
                pl.BlockSpec((K1, H1), lambda i: (0, 0)),       # w1 (VMEM-resident)
                pl.BlockSpec((1, H1), lambda i: (0, 0)),        # b1
                pl.BlockSpec((H1, H2p), lambda i: (0, 0)),      # w2 (padded)
                pl.BlockSpec((1, H2p), lambda i: (0, 0)),       # b2 (padded)
                pl.BlockSpec((H2p, NOp), lambda i: (0, 0)),     # w3 (padded)
                pl.BlockSpec((1, NOp), lambda i: (0, 0)),       # b3 (padded)
            ],
            out_specs=pl.BlockSpec((tm_eff, NOp), lambda i: (i, 0)),
        ),
        compiler_params=pltpu.CompilerParams(
            dimension_semantics=("parallel",),
        ),
    )(xp, w1b, b1, w2b, b2p, w3b, b3p)

    # Slice off batch/lane padding; restore the module's f32 output dtype (tiny).
    return out[:B, :NO].astype(jnp.float32)


if __name__ == "__main__":
    # Small, deterministic shapes consistent with the module.
    vocab_size = 100
    input_size = 32      # embedding dim
    fix_length = 8       # sequence length
    batch = 2

    key = jax.random.PRNGKey(0)
    k_emb, k_w1, k_b1, k_w2, k_b2, k_w3, k_b3, k_ids = jax.random.split(key, 8)

    emb_table = jax.random.normal(k_emb, (vocab_size, input_size), jnp.float32)

    in1 = fix_length * input_size   # 256
    w1 = jax.random.normal(k_w1, (in1, 512), jnp.float32) * 0.05
    b1 = jax.random.normal(k_b1, (1, 512), jnp.float32) * 0.05
    w2 = jax.random.normal(k_w2, (512, 32), jnp.float32) * 0.05
    b2 = jax.random.normal(k_b2, (1, 32), jnp.float32) * 0.05
    w3 = jax.random.normal(k_w3, (32, 8), jnp.float32) * 0.05
    b3 = jax.random.normal(k_b3, (1, 8), jnp.float32) * 0.05

    token_ids = jax.random.randint(k_ids, (batch, fix_length), 0, vocab_size, jnp.int32)

    out = mlp_forward(token_ids, emb_table, w1, b1, w2, b2, w3, b3,
                      fix_length, input_size)
    out = jax.block_until_ready(out)
    assert out.shape == (batch, 8)

    # Reference 1: same bf16-operand / f32-accumulate math as the kernel
    # (kernel additionally rounds the final store to bf16 -> modest tolerance).
    x_ref = jnp.take(emb_table, token_ids, axis=0).reshape(-1, in1)
    h = jnp.maximum(jnp.dot(x_ref.astype(jnp.bfloat16), w1.astype(jnp.bfloat16),
                            preferred_element_type=jnp.float32) + b1, 0.0)
    h = jnp.maximum(jnp.dot(h.astype(jnp.bfloat16), w2.astype(jnp.bfloat16),
                            preferred_element_type=jnp.float32) + b2, 0.0)
    ref_bf16 = jnp.dot(h.astype(jnp.bfloat16), w3.astype(jnp.bfloat16),
                       preferred_element_type=jnp.float32) + b3
    assert jnp.allclose(out, ref_bf16, atol=1e-2, rtol=1e-2)

    # Reference 2: full-f32 PyTorch-equivalent forward (loose tol for bf16 rounding).
    hf = jnp.maximum(x_ref @ w1 + b1, 0.0)
    hf = jnp.maximum(hf @ w2 + b2, 0.0)
    ref_f32 = hf @ w3 + b3
    assert jnp.allclose(out, ref_f32, atol=3e-2, rtol=3e-2)

    print("KERNEL_OK")
</pallas_src>

<mosaic_0001>
module attributes {stable_mosaic.version = 11 : i64} {
  func.func @mlp_kernel(%arg0: i32, %arg1: memref<256x256xbf16, #tpu.memory_space<vmem>>, %arg2: memref<256x512xbf16, #tpu.memory_space<vmem>>, %arg3: memref<1x512xf32, #tpu.memory_space<vmem>>, %arg4: memref<512x128xbf16, #tpu.memory_space<vmem>>, %arg5: memref<1x128xf32, #tpu.memory_space<vmem>>, %arg6: memref<128x128xbf16, #tpu.memory_space<vmem>>, %arg7: memref<1x128xf32, #tpu.memory_space<vmem>>, %arg8: memref<256x128xbf16, #tpu.memory_space<vmem>>) attributes {dimension_semantics = [#tpu.dimension_semantics<parallel>], iteration_bounds = array<i64: 1>, scalar_prefetch = 0 : i64, scratch_operands = 0 : i64, tpu.core_type = #tpu.core_type<tc>, window_params = [{transform_indices = @transform_0, window_bounds = array<i64: 256, 256>}, {pipeline_mode = #tpu.pipeline_mode<synchronous>, transform_indices = @transform_1, window_bounds = array<i64: 256, 512>}, {pipeline_mode = #tpu.pipeline_mode<synchronous>, transform_indices = @transform_2, window_bounds = array<i64: 1, 512>}, {pipeline_mode = #tpu.pipeline_mode<synchronous>, transform_indices = @transform_3, window_bounds = array<i64: 512, 128>}, {pipeline_mode = #tpu.pipeline_mode<synchronous>, transform_indices = @transform_4, window_bounds = array<i64: 1, 128>}, {pipeline_mode = #tpu.pipeline_mode<synchronous>, transform_indices = @transform_5, window_bounds = array<i64: 128, 128>}, {pipeline_mode = #tpu.pipeline_mode<synchronous>, transform_indices = @transform_6, window_bounds = array<i64: 1, 128>}, {transform_indices = @transform_7, window_bounds = array<i64: 256, 128>}]} {
    %c0 = arith.constant 0 : index
    %c0_0 = arith.constant 0 : index
    %0 = vector.load %arg1[%c0, %c0_0] : memref<256x256xbf16, #tpu.memory_space<vmem>>, vector<256x256xbf16>
    %c0_1 = arith.constant 0 : index
    %c0_2 = arith.constant 0 : index
    %1 = vector.load %arg2[%c0_1, %c0_2] : memref<256x512xbf16, #tpu.memory_space<vmem>>, vector<256x512xbf16>
    %cst = arith.constant dense<0.000000e+00> : vector<256x512xf32>
    %2 = tpu.matmul %0, %1, %cst {dimension_numbers = #tpu.dot_dimension_numbers<[1], [0], [0], [1], [0, 0, 1, 1], [], []>} : vector<256x256xbf16>, vector<256x512xbf16>, vector<256x512xf32> -> vector<256x512xf32>
    %c0_3 = arith.constant 0 : index
    %c0_4 = arith.constant 0 : index
    %3 = vector.load %arg3[%c0_3, %c0_4] : memref<1x512xf32, #tpu.memory_space<vmem>>, vector<1x512xf32>
    %4 = vector.broadcast %3 : vector<1x512xf32> to vector<256x512xf32>
    %5 = arith.addf %2, %4 : vector<256x512xf32>
    %cst_5 = arith.constant 0.000000e+00 : f32
    %6 = vector.broadcast %cst_5 : f32 to vector<256x512xf32>
    %7 = arith.maximumf %5, %6 : vector<256x512xf32>
    %8 = arith.truncf %7 : vector<256x512xf32> to vector<256x512xbf16>
    %c0_6 = arith.constant 0 : index
    %c0_7 = arith.constant 0 : index
    %9 = vector.load %arg4[%c0_6, %c0_7] : memref<512x128xbf16, #tpu.memory_space<vmem>>, vector<512x128xbf16>
    %cst_8 = arith.constant dense<0.000000e+00> : vector<256x128xf32>
    %10 = tpu.matmul %8, %9, %cst_8 {dimension_numbers = #tpu.dot_dimension_numbers<[1], [0], [0], [1], [0, 0, 1, 1], [], []>} : vector<256x512xbf16>, vector<512x128xbf16>, vector<256x128xf32> -> vector<256x128xf32>
    %c0_9 = arith.constant 0 : index
    %c0_10 = arith.constant 0 : index
    %11 = vector.load %arg5[%c0_9, %c0_10] : memref<1x128xf32, #tpu.memory_space<vmem>>, vector<1x128xf32>
    %12 = vector.broadcast %11 : vector<1x128xf32> to vector<256x128xf32>
    %13 = arith.addf %10, %12 : vector<256x128xf32>
    %cst_11 = arith.constant 0.000000e+00 : f32
    %14 = vector.broadcast %cst_11 : f32 to vector<256x128xf32>
    %15 = arith.maximumf %13, %14 : vector<256x128xf32>
    %16 = arith.truncf %15 : vector<256x128xf32> to vector<256x128xbf16>
    %c0_12 = arith.constant 0 : index
    %c0_13 = arith.constant 0 : index
    %17 = vector.load %arg6[%c0_12, %c0_13] : memref<128x128xbf16, #tpu.memory_space<vmem>>, vector<128x128xbf16>
    %cst_14 = arith.constant dense<0.000000e+00> : vector<256x128xf32>
    %18 = tpu.matmul %16, %17, %cst_14 {dimension_numbers = #tpu.dot_dimension_numbers<[1], [0], [0], [1], [0, 0, 1, 1], [], []>} : vector<256x128xbf16>, vector<128x128xbf16>, vector<256x128xf32> -> vector<256x128xf32>
    %c0_15 = arith.constant 0 : index
    %c0_16 = arith.constant 0 : index
    %19 = vector.load %arg7[%c0_15, %c0_16] : memref<1x128xf32, #tpu.memory_space<vmem>>, vector<1x128xf32>
    %20 = vector.broadcast %19 : vector<1x128xf32> to vector<256x128xf32>
    %21 = arith.addf %18, %20 : vector<256x128xf32>
    %22 = arith.truncf %21 : vector<256x128xf32> to vector<256x128xbf16>
    %c0_17 = arith.constant 0 : index
    %c0_18 = arith.constant 0 : index
    %23 = vector.load %arg8[%c0_17, %c0_18] : memref<256x128xbf16, #tpu.memory_space<vmem>>, vector<256x128xbf16>
    tpu.vector_store %arg8[%c0_17, %c0_18], %22 {strides = array<i32>} : memref<256x128xbf16, #tpu.memory_space<vmem>>, vector<256x128xbf16>,
    return
  }
  func.func @transform_0(%arg0: i32) -> (i32, i32) {
    %c0_i32 = arith.constant 0 : i32
    %c0_i32_0 = arith.constant 0 : i32
    return %arg0, %c0_i32 : i32, i32
  }
  func.func @transform_1(%arg0: i32) -> (i32, i32) {
    %c0_i32 = arith.constant 0 : i32
    %c0_i32_0 = arith.constant 0 : i32
    %c0_i32_1 = arith.constant 0 : i32
    return %c0_i32, %c0_i32_0 : i32, i32
  }
  func.func @transform_2(%arg0: i32) -> (i32, i32) {
    %c0_i32 = arith.constant 0 : i32
    %c0_i32_0 = arith.constant 0 : i32
    %c0_i32_1 = arith.constant 0 : i32
    return %c0_i32, %c0_i32_0 : i32, i32
  }
  func.func @transform_3(%arg0: i32) -> (i32, i32) {
    %c0_i32 = arith.constant 0 : i32
    %c0_i32_0 = arith.constant 0 : i32
    %c0_i32_1 = arith.constant 0 : i32
    return %c0_i32, %c0_i32_0 : i32, i32
  }
  func.func @transform_4(%arg0: i32) -> (i32, i32) {
    %c0_i32 = arith.constant 0 : i32
    %c0_i32_0 = arith.constant 0 : i32
    %c0_i32_1 = arith.constant 0 : i32
    return %c0_i32, %c0_i32_0 : i32, i32
  }
  func.func @transform_5(%arg0: i32) -> (i32, i32) {
    %c0_i32 = arith.constant 0 : i32
    %c0_i32_0 = arith.constant 0 : i32
    %c0_i32_1 = arith.constant 0 : i32
    return %c0_i32, %c0_i32_0 : i32, i32
  }
  func.func @transform_6(%arg0: i32) -> (i32, i32) {
    %c0_i32 = arith.constant 0 : i32
    %c0_i32_0 = arith.constant 0 : i32
    %c0_i32_1 = arith.constant 0 : i32
    return %c0_i32, %c0_i32_0 : i32, i32
  }
  func.func @transform_7(%arg0: i32) -> (i32, i32) {
    %c0_i32 = arith.constant 0 : i32
    %c0_i32_0 = arith.constant 0 : i32
    return %arg0, %c0_i32 : i32, i32
  }
}

</mosaic_0001>

<llo_original>
// kernel: tpu_custom_call.1
$region0: #{tpu_custom_call.1}
  #allocation0 [shape = 'u32[]', space=smem, size = 0x4, offset = 0x4, fixed_abs, tag = 'smem constant byte address 0x4 - core index']
  #allocation1 [shape = 'u32[72,128]{1,0:T(1,128)}', space=vmem, size = 0x9000, scoped, tag = 'internal scratch']
  %s0 = inlined_call_operand.hbm [shape: bf16[256,256], index: 0, kind: input, shape index: {}]
  %s1 = inlined_call_operand.hbm [shape: bf16[256,512], index: 1, kind: input, shape index: {}]
  %s2 = inlined_call_operand.hbm [shape: f32[1,512], index: 2, kind: input, shape index: {}]
  %s3 = inlined_call_operand.hbm [shape: bf16[512,128], index: 3, kind: input, shape index: {}]
  %s4 = inlined_call_operand.vmem [shape: f32[1,128], index: 4, kind: input, shape index: {}]
  %s5 = inlined_call_operand.hbm [shape: bf16[128,128], index: 5, kind: input, shape index: {}]
  %s6 = inlined_call_operand.vmem [shape: f32[1,128], index: 6, kind: input, shape index: {}]
  %s7 = inlined_call_operand.hbm [shape: bf16[256,128], index: 7, kind: output, shape index: {}]
  %s8 = sld [smem:[#allocation0]]
  $region58: #{tpu_custom_call.1} parent=0
    _
  %s10 = ssub.s32 1, %s8
  %s11 = scalar_select 0, %s10, %s8
  $region1: #{tpu_custom_call.1} parent=0
    #allocation2 [shape = 'u8[131072]{0}', space=vmem, size = 0x20000, scoped, tag = 'input window, operand 0, single buffered']
    #allocation3 [shape = 's32[1]{0}', space=sflag, size = 0x4, scoped, tag = 'scoped memory for tpu_custom_call.1']
    #allocation4 [shape = 's32[1]{0}', space=sflag, size = 0x4, scoped, tag = 'scoped memory for tpu_custom_call.1']
    #allocation5 [shape = 'u8[262144]{0}', space=vmem, size = 0x40000, scoped, tag = 'input window, operand 1, single buffered']
    #allocation6 [shape = 's32[1]{0}', space=sflag, size = 0x4, scoped, tag = 'scoped memory for tpu_custom_call.1']
    #allocation7 [shape = 'u8[2048]{0}', space=vmem, size = 0x800, scoped, tag = 'input window, operand 2, single buffered']
    #allocation8 [shape = 'u8[131072]{0}', space=vmem, size = 0x20000, scoped, tag = 'input window, operand 3, single buffered']
    #allocation9 [shape = 's32[1]{0}', space=sflag, size = 0x4, scoped, tag = 'scoped memory for tpu_custom_call.1']
    #allocation10 [shape = 'u8[32768]{0}', space=vmem, size = 0x8000, scoped, tag = 'input window, operand 5, single buffered']
    #allocation11 [shape = 'u8[65536]{0}', space=vmem, size = 0x10000, scoped, tag = 'output window, operand 0, single buffered']
    %12 = vsyncpa [#allocation3], 0
    %13 = vsyncpa [#allocation6], 0
    %14 = vsyncpa [#allocation9], 0
    %15 = vsyncpa [#allocation4], 0
    // Predicated region
    $region2: #{tpu_custom_call.1} parent=1 // pred_check
      _
    $region3: #{tpu_custom_call.1} parent=1 // pred_check_branch
      %17 = sbr.rel (0) target = $region5
    $region4: #{tpu_custom_call.1} parent=1 // pred_region
      %19 = vsyncadd [#allocation3], 0
      %s20 = sshll.u32 %s0, 4
      %s21 = int_to_ptr.hbm [resolvable:$true] %s20
      %s22 = sshll.u32 [#allocation2], 4
      %s23 = int_to_ptr.vmem [resolvable:$true] %s22
      %28 = dma.hbm_to_vmem [thread:$0]  %s21, 4096, %s23, [#allocation3], 128, 128, 8
    $region5: #{tpu_custom_call.1} parent=1 // pred_fallthru
      _
    // Predicated region
    $region6: #{tpu_custom_call.1} parent=1 // pred_check
      _
    $region7: #{tpu_custom_call.1} parent=1 // pred_check_branch
      %30 = sbr.rel (0) target = $region9
    $region8: #{tpu_custom_call.1} parent=1 // pred_region
      %32 = vsyncadd [#allocation6], 0
      %s33 = sshll.u32 %s1, 4
      %s34 = int_to_ptr.hbm [resolvable:$true] %s33
      %s35 = sshll.u32 [#allocation5], 4
      %s36 = int_to_ptr.vmem [resolvable:$true] %s35
      %41 = dma.hbm_to_vmem [thread:$0]  %s34, 8192, %s36, [#allocation6], 256, 256, 16
    $region9: #{tpu_custom_call.1} parent=1 // pred_fallthru
      _
    // Predicated region
    $region10: #{tpu_custom_call.1} parent=1 // pred_check
      _
    $region11: #{tpu_custom_call.1} parent=1 // pred_check_branch
      %43 = sbr.rel (0) target = $region13
    $region12: #{tpu_custom_call.1} parent=1 // pred_region
      %45 = vsyncadd [#allocation6], 0
      %s47 = sshll.u32 %s2, 4
      %s48 = int_to_ptr.hbm [resolvable:$true] %s47
      %s49 = sshll.u32 [#allocation7], 4
      %s50 = int_to_ptr.vmem [resolvable:$true] %s49
      %52 = dma.hbm_to_vmem [thread:$0]  %s48, 64, %s50, [#allocation6]
    $region13: #{tpu_custom_call.1} parent=1 // pred_fallthru
      _
    // Predicated region
    $region14: #{tpu_custom_call.1} parent=1 // pred_check
      _
    $region15: #{tpu_custom_call.1} parent=1 // pred_check_branch
      %54 = sbr.rel (0) target = $region17
    $region16: #{tpu_custom_call.1} parent=1 // pred_region
      %56 = vsyncadd [#allocation9], 0
      %s57 = sshll.u32 %s3, 4
      %s58 = int_to_ptr.hbm [resolvable:$true] %s57
      %s59 = sshll.u32 [#allocation8], 4
      %s60 = int_to_ptr.vmem [resolvable:$true] %s59
      %65 = dma.hbm_to_vmem [thread:$0]  %s58, 4096, %s60, [#allocation9], 64, 64, 4
    $region17: #{tpu_custom_call.1} parent=1 // pred_fallthru
      _
    // Predicated region
    $region18: #{tpu_custom_call.1} parent=1 // pred_check
      _
    $region19: #{tpu_custom_call.1} parent=1 // pred_check_branch
      %67 = sbr.rel (0) target = $region21
    $region20: #{tpu_custom_call.1} parent=1 // pred_region
      _
    $region21: #{tpu_custom_call.1} parent=1 // pred_fallthru
      _
    // Predicated region
    $region22: #{tpu_custom_call.1} parent=1 // pred_check
      _
    $region23: #{tpu_custom_call.1} parent=1 // pred_check_branch
      %69 = sbr.rel (0) target = $region25
    $region24: #{tpu_custom_call.1} parent=1 // pred_region
      %71 = vsyncadd [#allocation9], 0
      %s72 = sshll.u32 %s5, 4
      %s73 = int_to_ptr.hbm [resolvable:$true] %s72
      %s74 = sshll.u32 [#allocation10], 4
      %s75 = int_to_ptr.vmem [resolvable:$true] %s74
      %80 = dma.hbm_to_vmem [thread:$0]  %s73, 1024, %s75, [#allocation9], 64, 64, 4
    $region25: #{tpu_custom_call.1} parent=1 // pred_fallthru
      _
    // Predicated region
    $region26: #{tpu_custom_call.1} parent=1 // pred_check
      _
    $region27: #{tpu_custom_call.1} parent=1 // pred_check_branch
      %82 = sbr.rel (0) target = $region29
    $region28: #{tpu_custom_call.1} parent=1 // pred_region
      _
    $region29: #{tpu_custom_call.1} parent=1 // pred_fallthru
      _
    // Predicated region
    $region30: #{tpu_custom_call.1} parent=1 // pred_check
      _
    $region31: #{tpu_custom_call.1} parent=1 // pred_check_branch
      %84 = sbr.rel (0) target = $region33
    $region32: #{tpu_custom_call.1} parent=1 // pred_region
      %86 = dma.done [#allocation3], 4096
    $region33: #{tpu_custom_call.1} parent=1 // pred_fallthru
      _
    // Predicated region
    $region34: #{tpu_custom_call.1} parent=1 // pred_check
      _
    $region35: #{tpu_custom_call.1} parent=1 // pred_check_branch
      %88 = sbr.rel (0) target = $region37
    $region36: #{tpu_custom_call.1} parent=1 // pred_region
      %90 = dma.done [#allocation6], 8192
    $region37: #{tpu_custom_call.1} parent=1 // pred_fallthru
      _
    // Predicated region
    $region38: #{tpu_custom_call.1} parent=1 // pred_check
      _
    $region39: #{tpu_custom_call.1} parent=1 // pred_check_branch
      %92 = sbr.rel (0) target = $region41
    $region40: #{tpu_custom_call.1} parent=1 // pred_region
      %94 = dma.done [#allocation6], 64
    $region41: #{tpu_custom_call.1} parent=1 // pred_fallthru
      _
    // Predicated region
    $region42: #{tpu_custom_call.1} parent=1 // pred_check
      _
    $region43: #{tpu_custom_call.1} parent=1 // pred_check_branch
      %96 = sbr.rel (0) target = $region45
    $region44: #{tpu_custom_call.1} parent=1 // pred_region
      %98 = dma.done [#allocation9], 4096
    $region45: #{tpu_custom_call.1} parent=1 // pred_fallthru
      _
    // Predicated region
    $region46: #{tpu_custom_call.1} parent=1 // pred_check
      _
    $region47: #{tpu_custom_call.1} parent=1 // pred_check_branch
      %100 = sbr.rel (0) target = $region49
    $region48: #{tpu_custom_call.1} parent=1 // pred_region
      %102 = dma.done [#allocation9], 1024
    $region49: #{tpu_custom_call.1} parent=1 // pred_fallthru
      _
    %v103 = vld [vmem:[#allocation2] sm:$0xff]
    %v104 = vld [vmem:[#allocation2 + $0x8] sm:$0xff]
    %v105 = vld [vmem:[#allocation2 + $0x10] sm:$0xff]
    %v106 = vld [vmem:[#allocation2 + $0x18] sm:$0xff]
    %v107 = vld [vmem:[#allocation2 + $0x20] sm:$0xff]
    %v108 = vld [vmem:[#allocation2 + $0x28] sm:$0xff]
    %v109 = vld [vmem:[#allocation2 + $0x30] sm:$0xff]
    %v110 = vld [vmem:[#allocation2 + $0x38] sm:$0xff]
    %v111 = vld [vmem:[#allocation2 + $0x40] sm:$0xff]
    %v112 = vld [vmem:[#allocation2 + $0x48] sm:$0xff]
    %v113 = vld [vmem:[#allocation2 + $0x50] sm:$0xff]
    %v114 = vld [vmem:[#allocation2 + $0x58] sm:$0xff]
    %v115 = vld [vmem:[#allocation2 + $0x60] sm:$0xff]
    %v116 = vld [vmem:[#allocation2 + $0x68] sm:$0xff]
    %v117 = vld [vmem:[#allocation2 + $0x70] sm:$0xff]
    %v118 = vld [vmem:[#allocation2 + $0x78] sm:$0xff]
    %v119 = vld [vmem:[#allocation2 + $0x80] sm:$0xff]
    %v120 = vld [vmem:[#allocation2 + $0x88] sm:$0xff]
    %v121 = vld [vmem:[#allocation2 + $0x90] sm:$0xff]
    %v122 = vld [vmem:[#allocation2 + $0x98] sm:$0xff]
    %v123 = vld [vmem:[#allocation2 + $0xa0] sm:$0xff]
    %v124 = vld [vmem:[#allocation2 + $0xa8] sm:$0xff]
    %v125 = vld [vmem:[#allocation2 + $0xb0] sm:$0xff]
    %v126 = vld [vmem:[#allocation2 + $0xb8] sm:$0xff]
    %v127 = vld [vmem:[#allocation2 + $0xc0] sm:$0xff]
    %v128 = vld [vmem:[#allocation2 + $0xc8] sm:$0xff]
    %v129 = vld [vmem:[#allocation2 + $0xd0] sm:$0xff]
    %v130 = vld [vmem:[#allocation2 + $0xd8] sm:$0xff]
    %v131 = vld [vmem:[#allocation2 + $0xe0] sm:$0xff]
    %v132 = vld [vmem:[#allocation2 + $0xe8] sm:$0xff]
    %v133 = vld [vmem:[#allocation2 + $0xf0] sm:$0xff]
    %v134 = vld [vmem:[#allocation2 + $0xf8] sm:$0xff]
    %v135 = vld [vmem:[#allocation5] sm:$0xff]
    %v136 = vld [vmem:[#allocation5 + $0x8] sm:$0xff]
    %v137 = vld [vmem:[#allocation5 + $0x10] sm:$0xff]
    %v138 = vld [vmem:[#allocation5 + $0x18] sm:$0xff]
    %v139 = vld [vmem:[#allocation5 + $0x20] sm:$0xff]
    %v140 = vld [vmem:[#allocation5 + $0x28] sm:$0xff]
    %v141 = vld [vmem:[#allocation5 + $0x30] sm:$0xff]
    %v142 = vld [vmem:[#allocation5 + $0x38] sm:$0xff]
    %v143 = vld [vmem:[#allocation5 + $0x40] sm:$0xff]
    %v144 = vld [vmem:[#allocation5 + $0x48] sm:$0xff]
    %v145 = vld [vmem:[#allocation5 + $0x50] sm:$0xff]
    %v146 = vld [vmem:[#allocation5 + $0x58] sm:$0xff]
    %v147 = vld [vmem:[#allocation5 + $0x60] sm:$0xff]
    %v148 = vld [vmem:[#allocation5 + $0x68] sm:$0xff]
    %v149 = vld [vmem:[#allocation5 + $0x70] sm:$0xff]
    %v150 = vld [vmem:[#allocation5 + $0x78] sm:$0xff]
    %v151 = vld [vmem:[#allocation5 + $0x80] sm:$0xff]
    %v152 = vld [vmem:[#allocation5 + $0x88] sm:$0xff]
    %v153 = vld [vmem:[#allocation5 + $0x90] sm:$0xff]
    %v154 = vld [vmem:[#allocation5 + $0x98] sm:$0xff]
    %v155 = vld [vmem:[#allocation5 + $0xa0] sm:$0xff]
    %v156 = vld [vmem:[#allocation5 + $0xa8] sm:$0xff]
    %v157 = vld [vmem:[#allocation5 + $0xb0] sm:$0xff]
    %v158 = vld [vmem:[#allocation5 + $0xb8] sm:$0xff]
    %v159 = vld [vmem:[#allocation5 + $0xc0] sm:$0xff]
    %v160 = vld [vmem:[#allocation5 + $0xc8] sm:$0xff]
    %v161 = vld [vmem:[#allocation5 + $0xd0] sm:$0xff]
    %v162 = vld [vmem:[#allocation5 + $0xd8] sm:$0xff]
    %v163 = vld [vmem:[#allocation5 + $0xe0] sm:$0xff]
    %v164 = vld [vmem:[#allocation5 + $0xe8] sm:$0xff]
    %v165 = vld [vmem:[#allocation5 + $0xf0] sm:$0xff]
    %v166 = vld [vmem:[#allocation5 + $0xf8] sm:$0xff]
    %v167 = vld [vmem:[#allocation5 + $0x100] sm:$0xff]
    %v168 = vld [vmem:[#allocation5 + $0x108] sm:$0xff]
    %v169 = vld [vmem:[#allocation5 + $0x110] sm:$0xff]
    %v170 = vld [vmem:[#allocation5 + $0x118] sm:$0xff]
    %v171 = vld [vmem:[#allocation5 + $0x120] sm:$0xff]
    %v172 = vld [vmem:[#allocation5 + $0x128] sm:$0xff]
    %v173 = vld [vmem:[#allocation5 + $0x130] sm:$0xff]
    %v174 = vld [vmem:[#allocation5 + $0x138] sm:$0xff]
    %v175 = vld [vmem:[#allocation5 + $0x140] sm:$0xff]
    %v176 = vld [vmem:[#allocation5 + $0x148] sm:$0xff]
    %v177 = vld [vmem:[#allocation5 + $0x150] sm:$0xff]
    %v178 = vld [vmem:[#allocation5 + $0x158] sm:$0xff]
    %v179 = vld [vmem:[#allocation5 + $0x160] sm:$0xff]
    %v180 = vld [vmem:[#allocation5 + $0x168] sm:$0xff]
    %v181 = vld [vmem:[#allocation5 + $0x170] sm:$0xff]
    %v182 = vld [vmem:[#allocation5 + $0x178] sm:$0xff]
    %v183 = vld [vmem:[#allocation5 + $0x180] sm:$0xff]
    %v184 = vld [vmem:[#allocation5 + $0x188] sm:$0xff]
    %v185 = vld [vmem:[#allocation5 + $0x190] sm:$0xff]
    %v186 = vld [vmem:[#allocation5 + $0x198] sm:$0xff]
    %v187 = vld [vmem:[#allocation5 + $0x1a0] sm:$0xff]
    %v188 = vld [vmem:[#allocation5 + $0x1a8] sm:$0xff]
    %v189 = vld [vmem:[#allocation5 + $0x1b0] sm:$0xff]
    %v190 = vld [vmem:[#allocation5 + $0x1b8] sm:$0xff]
    %v191 = vld [vmem:[#allocation5 + $0x1c0] sm:$0xff]
    %v192 = vld [vmem:[#allocation5 + $0x1c8] sm:$0xff]
    %v193 = vld [vmem:[#allocation5 + $0x1d0] sm:$0xff]
    %v194 = vld [vmem:[#allocation5 + $0x1d8] sm:$0xff]
    %v195 = vld [vmem:[#allocation5 + $0x1e0] sm:$0xff]
    %v196 = vld [vmem:[#allocation5 + $0x1e8] sm:$0xff]
    %v197 = vld [vmem:[#allocation5 + $0x1f0] sm:$0xff]
    %v198 = vld [vmem:[#allocation5 + $0x1f8] sm:$0xff]
    %v199 = vld [vmem:[#allocation7] sm:$0xf]
    %v201 = vperm.slane %v199, 0
    %v202 = vperm.slane %v199, 1
    %v203 = vperm.slane %v199, 2
    %v204 = vperm.slane %v199, 3
    %v241 = vunpack.c.l.b16 %v103
    %v242 = vunpack.c.h.b16 %v103
    %v243 = vunpack.c.l.b16 %v104
    %v244 = vunpack.c.h.b16 %v104
    %v245 = vunpack.c.l.b16 %v105
    %v246 = vunpack.c.h.b16 %v105
    %v247 = vunpack.c.l.b16 %v106
    %v248 = vunpack.c.h.b16 %v106
    %v249 = vunpack.c.l.b16 %v107
    %v250 = vunpack.c.h.b16 %v107
    %v251 = vunpack.c.l.b16 %v108
    %v252 = vunpack.c.h.b16 %v108
    %v253 = vunpack.c.l.b16 %v109
    %v254 = vunpack.c.h.b16 %v109
    %v255 = vunpack.c.l.b16 %v110
    %v256 = vunpack.c.h.b16 %v110
    %v257 = vunpack.c.l.b16 %v111
    %v258 = vunpack.c.h.b16 %v111
    %v259 = vunpack.c.l.b16 %v112
    %v260 = vunpack.c.h.b16 %v112
    %v261 = vunpack.c.l.b16 %v113
    %v262 = vunpack.c.h.b16 %v113
    %v263 = vunpack.c.l.b16 %v114
    %v264 = vunpack.c.h.b16 %v114
    %v265 = vunpack.c.l.b16 %v115
    %v266 = vunpack.c.h.b16 %v115
    %v267 = vunpack.c.l.b16 %v116
    %v268 = vunpack.c.h.b16 %v116
    %v269 = vunpack.c.l.b16 %v117
    %v270 = vunpack.c.h.b16 %v117
    %v271 = vunpack.c.l.b16 %v118
    %v272 = vunpack.c.h.b16 %v118
    %v273 = vunpack.c.l.b16 %v119
    %v274 = vunpack.c.h.b16 %v119
    %v275 = vunpack.c.l.b16 %v120
    %v276 = vunpack.c.h.b16 %v120
    %v277 = vunpack.c.l.b16 %v121
    %v278 = vunpack.c.h.b16 %v121
    %v279 = vunpack.c.l.b16 %v122
    %v280 = vunpack.c.h.b16 %v122
    %v281 = vunpack.c.l.b16 %v123
    %v282 = vunpack.c.h.b16 %v123
    %v283 = vunpack.c.l.b16 %v124
    %v284 = vunpack.c.h.b16 %v124
    %v285 = vunpack.c.l.b16 %v125
    %v286 = vunpack.c.h.b16 %v125
    %v287 = vunpack.c.l.b16 %v126
    %v288 = vunpack.c.h.b16 %v126
    %v289 = vunpack.c.l.b16 %v127
    %v290 = vunpack.c.h.b16 %v127
    %v291 = vunpack.c.l.b16 %v128
    %v292 = vunpack.c.h.b16 %v128
    %v293 = vunpack.c.l.b16 %v129
    %v294 = vunpack.c.h.b16 %v129
    %v295 = vunpack.c.l.b16 %v130
    %v296 = vunpack.c.h.b16 %v130
    %v297 = vunpack.c.l.b16 %v131
    %v298 = vunpack.c.h.b16 %v131
    %v299 = vunpack.c.l.b16 %v132
    %v300 = vunpack.c.h.b16 %v132
    %v301 = vunpack.c.l.b16 %v133
    %v302 = vunpack.c.h.b16 %v133
    %v303 = vunpack.c.l.b16 %v134
    %v304 = vunpack.c.h.b16 %v134
    %v305 = vpack.c.b16 %v243, %v241
    %v306 = vpack.c.b16 %v244, %v242
    %v307 = vpack.c.b16 %v247, %v245
    %v308 = vpack.c.b16 %v248, %v246
    %v309 = vpack.c.b16 %v251, %v249
    %v310 = vpack.c.b16 %v252, %v250
    %v311 = vpack.c.b16 %v255, %v253
    %v312 = vpack.c.b16 %v256, %v254
    %v313 = vpack.c.b16 %v259, %v257
    %v314 = vpack.c.b16 %v260, %v258
    %v315 = vpack.c.b16 %v263, %v261
    %v316 = vpack.c.b16 %v264, %v262
    %v317 = vpack.c.b16 %v267, %v265
    %v318 = vpack.c.b16 %v268, %v266
    %v319 = vpack.c.b16 %v271, %v269
    %v320 = vpack.c.b16 %v272, %v270
    %v321 = vpack.c.b16 %v275, %v273
    %v322 = vpack.c.b16 %v276, %v274
    %v323 = vpack.c.b16 %v279, %v277
    %v324 = vpack.c.b16 %v280, %v278
    %v325 = vpack.c.b16 %v283, %v281
    %v326 = vpack.c.b16 %v284, %v282
    %v327 = vpack.c.b16 %v287, %v285
    %v328 = vpack.c.b16 %v288, %v286
    %v329 = vpack.c.b16 %v291, %v289
    %v330 = vpack.c.b16 %v292, %v290
    %v331 = vpack.c.b16 %v295, %v293
    %v332 = vpack.c.b16 %v296, %v294
    %v333 = vpack.c.b16 %v299, %v297
    %v334 = vpack.c.b16 %v300, %v298
    %v335 = vpack.c.b16 %v303, %v301
    %v336 = vpack.c.b16 %v304, %v302
    %v433 = vunpack.c.l.b16 %v135
    %v434 = vunpack.c.h.b16 %v135
    %v435 = vunpack.c.l.b16 %v136
    %v436 = vunpack.c.h.b16 %v136
    %v437 = vunpack.c.l.b16 %v137
    %v438 = vunpack.c.h.b16 %v137
    %v439 = vunpack.c.l.b16 %v138
    %v440 = vunpack.c.h.b16 %v138
    %v441 = vunpack.c.l.b16 %v139
    %v442 = vunpack.c.h.b16 %v139
    %v443 = vunpack.c.l.b16 %v140
    %v444 = vunpack.c.h.b16 %v140
    %v445 = vunpack.c.l.b16 %v141
    %v446 = vunpack.c.h.b16 %v141
    %v447 = vunpack.c.l.b16 %v142
    %v448 = vunpack.c.h.b16 %v142
    %v449 = vunpack.c.l.b16 %v143
    %v450 = vunpack.c.h.b16 %v143
    %v451 = vunpack.c.l.b16 %v144
    %v452 = vunpack.c.h.b16 %v144
    %v453 = vunpack.c.l.b16 %v145
    %v454 = vunpack.c.h.b16 %v145
    %v455 = vunpack.c.l.b16 %v146
    %v456 = vunpack.c.h.b16 %v146
    %v457 = vunpack.c.l.b16 %v147
    %v458 = vunpack.c.h.b16 %v147
    %v459 = vunpack.c.l.b16 %v148
    %v460 = vunpack.c.h.b16 %v148
    %v461 = vunpack.c.l.b16 %v149
    %v462 = vunpack.c.h.b16 %v149
    %v463 = vunpack.c.l.b16 %v150
    %v464 = vunpack.c.h.b16 %v150
    %v465 = vunpack.c.l.b16 %v151
    %v466 = vunpack.c.h.b16 %v151
    %v467 = vunpack.c.l.b16 %v152
    %v468 = vunpack.c.h.b16 %v152
    %v469 = vunpack.c.l.b16 %v153
    %v470 = vunpack.c.h.b16 %v153
    %v471 = vunpack.c.l.b16 %v154
    %v472 = vunpack.c.h.b16 %v154
    %v473 = vunpack.c.l.b16 %v155
    %v474 = vunpack.c.h.b16 %v155
    %v475 = vunpack.c.l.b16 %v156
    %v476 = vunpack.c.h.b16 %v156
    %v477 = vunpack.c.l.b16 %v157
    %v478 = vunpack.c.h.b16 %v157
    %v479 = vunpack.c.l.b16 %v158
    %v480 = vunpack.c.h.b16 %v158
    %v481 = vunpack.c.l.b16 %v159
    %v482 = vunpack.c.h.b16 %v159
    %v483 = vunpack.c.l.b16 %v160
    %v484 = vunpack.c.h.b16 %v160
    %v485 = vunpack.c.l.b16 %v161
    %v486 = vunpack.c.h.b16 %v161
    %v487 = vunpack.c.l.b16 %v162
    %v488 = vunpack.c.h.b16 %v162
    %v489 = vunpack.c.l.b16 %v163
    %v490 = vunpack.c.h.b16 %v163
    %v491 = vunpack.c.l.b16 %v164
    %v492 = vunpack.c.h.b16 %v164
    %v493 = vunpack.c.l.b16 %v165
    %v494 = vunpack.c.h.b16 %v165
    %v495 = vunpack.c.l.b16 %v166
    %v496 = vunpack.c.h.b16 %v166
    %v497 = vunpack.c.l.b16 %v167
    %v498 = vunpack.c.h.b16 %v167
    %v499 = vunpack.c.l.b16 %v168
    %v500 = vunpack.c.h.b16 %v168
    %v501 = vunpack.c.l.b16 %v169
    %v502 = vunpack.c.h.b16 %v169
    %v503 = vunpack.c.l.b16 %v170
    %v504 = vunpack.c.h.b16 %v170
    %v505 = vunpack.c.l.b16 %v171
    %v506 = vunpack.c.h.b16 %v171
    %v507 = vunpack.c.l.b16 %v172
    %v508 = vunpack.c.h.b16 %v172
    %v509 = vunpack.c.l.b16 %v173
    %v510 = vunpack.c.h.b16 %v173
    %v511 = vunpack.c.l.b16 %v174
    %v512 = vunpack.c.h.b16 %v174
    %v513 = vunpack.c.l.b16 %v175
    %v514 = vunpack.c.h.b16 %v175
    %v515 = vunpack.c.l.b16 %v176
    %v516 = vunpack.c.h.b16 %v176
    %v517 = vunpack.c.l.b16 %v177
    %v518 = vunpack.c.h.b16 %v177
    %v519 = vunpack.c.l.b16 %v178
    %v520 = vunpack.c.h.b16 %v178
    %v521 = vunpack.c.l.b16 %v179
    %v522 = vunpack.c.h.b16 %v179
    %v523 = vunpack.c.l.b16 %v180
    %v524 = vunpack.c.h.b16 %v180
    %v525 = vunpack.c.l.b16 %v181
    %v526 = vunpack.c.h.b16 %v181
    %v527 = vunpack.c.l.b16 %v182
    %v528 = vunpack.c.h.b16 %v182
    %v529 = vunpack.c.l.b16 %v183
    %v530 = vunpack.c.h.b16 %v183
    %v531 = vunpack.c.l.b16 %v184
    %v532 = vunpack.c.h.b16 %v184
    %v533 = vunpack.c.l.b16 %v185
    %v534 = vunpack.c.h.b16 %v185
    %v535 = vunpack.c.l.b16 %v186
    %v536 = vunpack.c.h.b16 %v186
    %v537 = vunpack.c.l.b16 %v187
    %v538 = vunpack.c.h.b16 %v187
    %v539 = vunpack.c.l.b16 %v188
    %v540 = vunpack.c.h.b16 %v188
    %v541 = vunpack.c.l.b16 %v189
    %v542 = vunpack.c.h.b16 %v189
    %v543 = vunpack.c.l.b16 %v190
    %v544 = vunpack.c.h.b16 %v190
    %v545 = vunpack.c.l.b16 %v191
    %v546 = vunpack.c.h.b16 %v191
    %v547 = vunpack.c.l.b16 %v192
    %v548 = vunpack.c.h.b16 %v192
    %v549 = vunpack.c.l.b16 %v193
    %v550 = vunpack.c.h.b16 %v193
    %v551 = vunpack.c.l.b16 %v194
    %v552 = vunpack.c.h.b16 %v194
    %v553 = vunpack.c.l.b16 %v195
    %v554 = vunpack.c.h.b16 %v195
    %v555 = vunpack.c.l.b16 %v196
    %v556 = vunpack.c.h.b16 %v196
    %v557 = vunpack.c.l.b16 %v197
    %v558 = vunpack.c.h.b16 %v197
    %v559 = vunpack.c.l.b16 %v198
    %v560 = vunpack.c.h.b16 %v198
    %v561 = vpack.c.b16 %v437, %v433
    %v562 = vpack.c.b16 %v438, %v434
    %v563 = vpack.c.b16 %v439, %v435
    %v564 = vpack.c.b16 %v440, %v436
    %v565 = vpack.c.b16 %v445, %v441
    %v566 = vpack.c.b16 %v446, %v442
    %v567 = vpack.c.b16 %v447, %v443
    %v568 = vpack.c.b16 %v448, %v444
    %v569 = vpack.c.b16 %v453, %v449
    %v570 = vpack.c.b16 %v454, %v450
    %v571 = vpack.c.b16 %v455, %v451
    %v572 = vpack.c.b16 %v456, %v452
    %v573 = vpack.c.b16 %v461, %v457
    %v574 = vpack.c.b16 %v462, %v458
    %v575 = vpack.c.b16 %v463, %v459
    %v576 = vpack.c.b16 %v464, %v460
    %v577 = vpack.c.b16 %v469, %v465
    %v578 = vpack.c.b16 %v470, %v466
    %v579 = vpack.c.b16 %v471, %v467
    %v580 = vpack.c.b16 %v472, %v468
    %v581 = vpack.c.b16 %v477, %v473
    %v582 = vpack.c.b16 %v478, %v474
    %v583 = vpack.c.b16 %v479, %v475
    %v584 = vpack.c.b16 %v480, %v476
    %v585 = vpack.c.b16 %v485, %v481
    %v586 = vpack.c.b16 %v486, %v482
    %v587 = vpack.c.b16 %v487, %v483
    %v588 = vpack.c.b16 %v488, %v484
    %v589 = vpack.c.b16 %v493, %v489
    %v590 = vpack.c.b16 %v494, %v490
    %v591 = vpack.c.b16 %v495, %v491
    %v592 = vpack.c.b16 %v496, %v492
    %v593 = vpack.c.b16 %v501, %v497
    %v594 = vpack.c.b16 %v502, %v498
    %v595 = vpack.c.b16 %v503, %v499
    %v596 = vpack.c.b16 %v504, %v500
    %v597 = vpack.c.b16 %v509, %v505
    %v598 = vpack.c.b16 %v510, %v506
    %v599 = vpack.c.b16 %v511, %v507
    %v600 = vpack.c.b16 %v512, %v508
    %v601 = vpack.c.b16 %v517, %v513
    %v602 = vpack.c.b16 %v518, %v514
    %v603 = vpack.c.b16 %v519, %v515
    %v604 = vpack.c.b16 %v520, %v516
    %v605 = vpack.c.b16 %v525, %v521
    %v606 = vpack.c.b16 %v526, %v522
    %v607 = vpack.c.b16 %v527, %v523
    %v608 = vpack.c.b16 %v528, %v524
    %v609 = vpack.c.b16 %v533, %v529
    %v610 = vpack.c.b16 %v534, %v530
    %v611 = vpack.c.b16 %v535, %v531
    %v612 = vpack.c.b16 %v536, %v532
    %v613 = vpack.c.b16 %v541, %v537
    %v614 = vpack.c.b16 %v542, %v538
    %v615 = vpack.c.b16 %v543, %v539
    %v616 = vpack.c.b16 %v544, %v540
    %v617 = vpack.c.b16 %v549, %v545
    %v618 = vpack.c.b16 %v550, %v546
    %v619 = vpack.c.b16 %v551, %v547
    %v620 = vpack.c.b16 %v552, %v548
    %v621 = vpack.c.b16 %v557, %v553
    %v622 = vpack.c.b16 %v558, %v554
    %v623 = vpack.c.b16 %v559, %v555
    %v624 = vpack.c.b16 %v560, %v556
    %689 = vmatpush.bf16.msra.mxu0 %v589
    %690 = vmatpush.bf16.msra.mxu0 %v585
    %691 = vmatpush.bf16.msra.mxu0 %v581
    %692 = vmatpush.bf16.msra.mxu0 %v577
    %693 = vmatpush.bf16.msra.mxu0 %v573
    %694 = vmatpush.bf16.msra.mxu0 %v569
    %695 = vmatpush.bf16.msra.mxu0 %v565
    %696 = vmatpush.bf16.msra.mxu0 %v561
    %697 = vmatmul.bf16.gmra.mxu0 %v305
    %v698 = vpop.f32.mrf.mxu0
    %v699 = vadd.f32 %v201, %v698
    %v700 = vpop.f32.mrf.mxu0
    %v701 = vadd.f32 %v201, %v700
    %702 = vmatmul.bf16.gmra.mxu0 %v307
    %v703 = vpop.f32.mrf.mxu0
    %v704 = vadd.f32 %v201, %v703
    %v705 = vpop.f32.mrf.mxu0
    %v706 = vadd.f32 %v201, %v705
    %707 = vmatmul.bf16.gmra.mxu0 %v309
    %v708 = vpop.f32.mrf.mxu0
    %v709 = vadd.f32 %v201, %v708
    %v710 = vpop.f32.mrf.mxu0
    %v711 = vadd.f32 %v201, %v710
    %712 = vmatmul.bf16.gmra.mxu0 %v311
    %v713 = vpop.f32.mrf.mxu0
    %v714 = vadd.f32 %v201, %v713
    %v715 = vpop.f32.mrf.mxu0
    %v716 = vadd.f32 %v201, %v715
    %717 = vmatmul.bf16.gmra.mxu0 %v313
    %v718 = vpop.f32.mrf.mxu0
    %v719 = vadd.f32 %v201, %v718
    %v720 = vpop.f32.mrf.mxu0
    %v721 = vadd.f32 %v201, %v720
    %722 = vmatmul.bf16.gmra.mxu0 %v315
    %v723 = vpop.f32.mrf.mxu0
    %v724 = vadd.f32 %v201, %v723
    %v725 = vpop.f32.mrf.mxu0
    %v726 = vadd.f32 %v201, %v725
    %727 = vmatmul.bf16.gmra.mxu0 %v317
    %v728 = vpop.f32.mrf.mxu0
    %v729 = vadd.f32 %v201, %v728
    %v730 = vpop.f32.mrf.mxu0
    %v731 = vadd.f32 %v201, %v730
    %732 = vmatmul.bf16.gmra.mxu0 %v319
    %v733 = vpop.f32.mrf.mxu0
    %v734 = vadd.f32 %v201, %v733
    %v735 = vpop.f32.mrf.mxu0
    %v736 = vadd.f32 %v201, %v735
    %737 = vmatmul.bf16.gmra.mxu0 %v321
    %v738 = vpop.f32.mrf.mxu0
    %v739 = vadd.f32 %v201, %v738
    %v740 = vpop.f32.mrf.mxu0
    %v741 = vadd.f32 %v201, %v740
    %742 = vmatmul.bf16.gmra.mxu0 %v323
    %v743 = vpop.f32.mrf.mxu0
    %v744 = vadd.f32 %v201, %v743
    %v745 = vpop.f32.mrf.mxu0
    %v746 = vadd.f32 %v201, %v745
    %747 = vmatmul.bf16.gmra.mxu0 %v325
    %v748 = vpop.f32.mrf.mxu0
    %v749 = vadd.f32 %v201, %v748
    %v750 = vpop.f32.mrf.mxu0
    %v751 = vadd.f32 %v201, %v750
    %752 = vmatmul.bf16.gmra.mxu0 %v327
    %v753 = vpop.f32.mrf.mxu0
    %v754 = vadd.f32 %v201, %v753
    %v755 = vpop.f32.mrf.mxu0
    %v756 = vadd.f32 %v201, %v755
    %757 = vmatmul.bf16.gmra.mxu0 %v329
    %v758 = vpop.f32.mrf.mxu0
    %v759 = vadd.f32 %v201, %v758
    %v760 = vpop.f32.mrf.mxu0
    %v761 = vadd.f32 %v201, %v760
    %762 = vmatmul.bf16.gmra.mxu0 %v331
    %v763 = vpop.f32.mrf.mxu0
    %v764 = vadd.f32 %v201, %v763
    %v765 = vpop.f32.mrf.mxu0
    %v766 = vadd.f32 %v201, %v765
    %767 = vmatmul.bf16.gmra.mxu0 %v333
    %v768 = vpop.f32.mrf.mxu0
    %v769 = vadd.f32 %v201, %v768
    %v770 = vpop.f32.mrf.mxu0
    %v771 = vadd.f32 %v201, %v770
    %772 = vmatmul.bf16.gmra.mxu0 %v335
    %v773 = vpop.f32.mrf.mxu0
    %v774 = vadd.f32 %v201, %v773
    %v775 = vpop.f32.mrf.mxu0
    %v776 = vadd.f32 %v201, %v775
    %777 = vdwg.mxu0
    %778 = vmatpush.bf16.msra.mxu0 %v621
    %779 = vmatpush.bf16.msra.mxu0 %v617
    %780 = vmatpush.bf16.msra.mxu0 %v613
    %781 = vmatpush.bf16.msra.mxu0 %v609
    %782 = vmatpush.bf16.msra.mxu0 %v605
    %783 = vmatpush.bf16.msra.mxu0 %v601
    %784 = vmatpush.bf16.msra.mxu0 %v597
    %785 = vmatpush.bf16.msra.mxu0 %v593
    %786 = vmatmul.bf16.gmra.mxu0 %v306
    %v787 = vpop.f32.mrf.mxu0
    %v788 = vadd.f32 %v699, %v787
    %v789 = vpop.f32.mrf.mxu0
    %v790 = vadd.f32 %v701, %v789
    %791 = vmatmul.bf16.gmra.mxu0 %v308
    %v792 = vpop.f32.mrf.mxu0
    %v793 = vadd.f32 %v704, %v792
    %v794 = vpop.f32.mrf.mxu0
    %v795 = vadd.f32 %v706, %v794
    %796 = vmatmul.bf16.gmra.mxu0 %v310
    %v797 = vpop.f32.mrf.mxu0
    %v798 = vadd.f32 %v709, %v797
    %v799 = vpop.f32.mrf.mxu0
    %v800 = vadd.f32 %v711, %v799
    %801 = vmatmul.bf16.gmra.mxu0 %v312
    %v802 = vpop.f32.mrf.mxu0
    %v803 = vadd.f32 %v714, %v802
    %v804 = vpop.f32.mrf.mxu0
    %v805 = vadd.f32 %v716, %v804
    %806 = vmatmul.bf16.gmra.mxu0 %v314
    %v807 = vpop.f32.mrf.mxu0
    %v808 = vadd.f32 %v719, %v807
    %v809 = vpop.f32.mrf.mxu0
    %v810 = vadd.f32 %v721, %v809
    %811 = vmatmul.bf16.gmra.mxu0 %v316
    %v812 = vpop.f32.mrf.mxu0
    %v813 = vadd.f32 %v724, %v812
    %v814 = vpop.f32.mrf.mxu0
    %v815 = vadd.f32 %v726, %v814
    %816 = vmatmul.bf16.gmra.mxu0 %v318
    %v817 = vpop.f32.mrf.mxu0
    %v818 = vadd.f32 %v729, %v817
    %v819 = vpop.f32.mrf.mxu0
    %v820 = vadd.f32 %v731, %v819
    %821 = vmatmul.bf16.gmra.mxu0 %v320
    %v822 = vpop.f32.mrf.mxu0
    %v823 = vadd.f32 %v734, %v822
    %v824 = vpop.f32.mrf.mxu0
    %v825 = vadd.f32 %v736, %v824
    %826 = vmatmul.bf16.gmra.mxu0 %v322
    %v827 = vpop.f32.mrf.mxu0
    %v828 = vadd.f32 %v739, %v827
    %v829 = vpop.f32.mrf.mxu0
    %v830 = vadd.f32 %v741, %v829
    %831 = vmatmul.bf16.gmra.mxu0 %v324
    %v832 = vpop.f32.mrf.mxu0
    %v833 = vadd.f32 %v744, %v832
    %v834 = vpop.f32.mrf.mxu0
    %v835 = vadd.f32 %v746, %v834
    %836 = vmatmul.bf16.gmra.mxu0 %v326
    %v837 = vpop.f32.mrf.mxu0
    %v838 = vadd.f32 %v749, %v837
    %v839 = vpop.f32.mrf.mxu0
    %v840 = vadd.f32 %v751, %v839
    %841 = vmatmul.bf16.gmra.mxu0 %v328
    %v842 = vpop.f32.mrf.mxu0
    %v843 = vadd.f32 %v754, %v842
    %v844 = vpop.f32.mrf.mxu0
    %v845 = vadd.f32 %v756, %v844
    %846 = vmatmul.bf16.gmra.mxu0 %v330
    %v847 = vpop.f32.mrf.mxu0
    %v848 = vadd.f32 %v759, %v847
    %v849 = vpop.f32.mrf.mxu0
    %v850 = vadd.f32 %v761, %v849
    %851 = vmatmul.bf16.gmra.mxu0 %v332
    %v852 = vpop.f32.mrf.mxu0
    %v853 = vadd.f32 %v764, %v852
    %v854 = vpop.f32.mrf.mxu0
    %v855 = vadd.f32 %v766, %v854
    %856 = vmatmul.bf16.gmra.mxu0 %v334
    %v857 = vpop.f32.mrf.mxu0
    %v858 = vadd.f32 %v769, %v857
    %v859 = vpop.f32.mrf.mxu0
    %v860 = vadd.f32 %v771, %v859
    %861 = vmatmul.bf16.gmra.mxu0 %v336
    %v862 = vpop.f32.mrf.mxu0
    %v863 = vadd.f32 %v774, %v862
    %v864 = vpop.f32.mrf.mxu0
    %v865 = vadd.f32 %v776, %v864
    %866 = vdwg.mxu0
    %867 = vmatpush.bf16.msra.mxu0 %v590
    %868 = vmatpush.bf16.msra.mxu0 %v586
    %869 = vmatpush.bf16.msra.mxu0 %v582
    %870 = vmatpush.bf16.msra.mxu0 %v578
    %871 = vmatpush.bf16.msra.mxu0 %v574
    %872 = vmatpush.bf16.msra.mxu0 %v570
    %873 = vmatpush.bf16.msra.mxu0 %v566
    %874 = vmatpush.bf16.msra.mxu0 %v562
    %875 = vmatmul.bf16.gmra.mxu0 %v305
    %v876 = vpop.f32.mrf.mxu0
    %v877 = vadd.f32 %v202, %v876
    %v878 = vpop.f32.mrf.mxu0
    %v879 = vadd.f32 %v202, %v878
    %880 = vmatmul.bf16.gmra.mxu0 %v307
    %v881 = vpop.f32.mrf.mxu0
    %v882 = vadd.f32 %v202, %v881
    %v883 = vpop.f32.mrf.mxu0
    %v884 = vadd.f32 %v202, %v883
    %885 = vmatmul.bf16.gmra.mxu0 %v309
    %v886 = vpop.f32.mrf.mxu0
    %v887 = vadd.f32 %v202, %v886
    %v888 = vpop.f32.mrf.mxu0
    %v889 = vadd.f32 %v202, %v888
    %890 = vmatmul.bf16.gmra.mxu0 %v311
    %v891 = vpop.f32.mrf.mxu0
    %v892 = vadd.f32 %v202, %v891
    %v893 = vpop.f32.mrf.mxu0
    %v894 = vadd.f32 %v202, %v893
    %895 = vmatmul.bf16.gmra.mxu0 %v313
    %v896 = vpop.f32.mrf.mxu0
    %v897 = vadd.f32 %v202, %v896
    %v898 = vpop.f32.mrf.mxu0
    %v899 = vadd.f32 %v202, %v898
    %900 = vmatmul.bf16.gmra.mxu0 %v315
    %v901 = vpop.f32.mrf.mxu0
    %v902 = vadd.f32 %v202, %v901
    %v903 = vpop.f32.mrf.mxu0
    %v904 = vadd.f32 %v202, %v903
    %905 = vmatmul.bf16.gmra.mxu0 %v317
    %v906 = vpop.f32.mrf.mxu0
    %v907 = vadd.f32 %v202, %v906
    %v908 = vpop.f32.mrf.mxu0
    %v909 = vadd.f32 %v202, %v908
    %910 = vmatmul.bf16.gmra.mxu0 %v319
    %v911 = vpop.f32.mrf.mxu0
    %v912 = vadd.f32 %v202, %v911
    %v913 = vpop.f32.mrf.mxu0
    %v914 = vadd.f32 %v202, %v913
    %915 = vmatmul.bf16.gmra.mxu0 %v321
    %v916 = vpop.f32.mrf.mxu0
    %v917 = vadd.f32 %v202, %v916
    %v918 = vpop.f32.mrf.mxu0
    %v919 = vadd.f32 %v202, %v918
    %920 = vmatmul.bf16.gmra.mxu0 %v323
    %v921 = vpop.f32.mrf.mxu0
    %v922 = vadd.f32 %v202, %v921
    %v923 = vpop.f32.mrf.mxu0
    %v924 = vadd.f32 %v202, %v923
    %925 = vmatmul.bf16.gmra.mxu0 %v325
    %v926 = vpop.f32.mrf.mxu0
    %v927 = vadd.f32 %v202, %v926
    %v928 = vpop.f32.mrf.mxu0
    %v929 = vadd.f32 %v202, %v928
    %930 = vmatmul.bf16.gmra.mxu0 %v327
    %v931 = vpop.f32.mrf.mxu0
    %v932 = vadd.f32 %v202, %v931
    %v933 = vpop.f32.mrf.mxu0
    %v934 = vadd.f32 %v202, %v933
    %935 = vmatmul.bf16.gmra.mxu0 %v329
    %v936 = vpop.f32.mrf.mxu0
    %v937 = vadd.f32 %v202, %v936
    %v938 = vpop.f32.mrf.mxu0
    %v939 = vadd.f32 %v202, %v938
    %940 = vmatmul.bf16.gmra.mxu0 %v331
    %v941 = vpop.f32.mrf.mxu0
    %v942 = vadd.f32 %v202, %v941
    %v943 = vpop.f32.mrf.mxu0
    %v944 = vadd.f32 %v202, %v943
    %945 = vmatmul.bf16.gmra.mxu0 %v333
    %v946 = vpop.f32.mrf.mxu0
    %v947 = vadd.f32 %v202, %v946
    %v948 = vpop.f32.mrf.mxu0
    %v949 = vadd.f32 %v202, %v948
    %950 = vmatmul.bf16.gmra.mxu0 %v335
    %v951 = vpop.f32.mrf.mxu0
    %v952 = vadd.f32 %v202, %v951
    %v953 = vpop.f32.mrf.mxu0
    %v954 = vadd.f32 %v202, %v953
    %955 = vdwg.mxu0
    %956 = vmatpush.bf16.msra.mxu0 %v622
    %957 = vmatpush.bf16.msra.mxu0 %v618
    %958 = vmatpush.bf16.msra.mxu0 %v614
    %959 = vmatpush.bf16.msra.mxu0 %v610
    %960 = vmatpush.bf16.msra.mxu0 %v606
    %961 = vmatpush.bf16.msra.mxu0 %v602
    %962 = vmatpush.bf16.msra.mxu0 %v598
    %963 = vmatpush.bf16.msra.mxu0 %v594
    %964 = vmatmul.bf16.gmra.mxu0 %v306
    %v965 = vpop.f32.mrf.mxu0
    %v966 = vadd.f32 %v877, %v965
    %v967 = vpop.f32.mrf.mxu0
    %v968 = vadd.f32 %v879, %v967
    %969 = vmatmul.bf16.gmra.mxu0 %v308
    %v970 = vpop.f32.mrf.mxu0
    %v971 = vadd.f32 %v882, %v970
    %v972 = vpop.f32.mrf.mxu0
    %v973 = vadd.f32 %v884, %v972
    %974 = vmatmul.bf16.gmra.mxu0 %v310
    %v975 = vpop.f32.mrf.mxu0
    %v976 = vadd.f32 %v887, %v975
    %v977 = vpop.f32.mrf.mxu0
    %v978 = vadd.f32 %v889, %v977
    %979 = vmatmul.bf16.gmra.mxu0 %v312
    %v980 = vpop.f32.mrf.mxu0
    %v981 = vadd.f32 %v892, %v980
    %v982 = vpop.f32.mrf.mxu0
    %v983 = vadd.f32 %v894, %v982
    %984 = vmatmul.bf16.gmra.mxu0 %v314
    %v985 = vpop.f32.mrf.mxu0
    %v986 = vadd.f32 %v897, %v985
    %v987 = vpop.f32.mrf.mxu0
    %v988 = vadd.f32 %v899, %v987
    %989 = vmatmul.bf16.gmra.mxu0 %v316
    %v990 = vpop.f32.mrf.mxu0
    %v991 = vadd.f32 %v902, %v990
    %v992 = vpop.f32.mrf.mxu0
    %v993 = vadd.f32 %v904, %v992
    %994 = vmatmul.bf16.gmra.mxu0 %v318
    %v995 = vpop.f32.mrf.mxu0
    %v996 = vadd.f32 %v907, %v995
    %v997 = vpop.f32.mrf.mxu0
    %v998 = vadd.f32 %v909, %v997
    %999 = vmatmul.bf16.gmra.mxu0 %v320
    %v1000 = vpop.f32.mrf.mxu0
    %v1001 = vadd.f32 %v912, %v1000
    %v1002 = vpop.f32.mrf.mxu0
    %v1003 = vadd.f32 %v914, %v1002
    %1004 = vmatmul.bf16.gmra.mxu0 %v322
    %v1005 = vpop.f32.mrf.mxu0
    %v1006 = vadd.f32 %v917, %v1005
    %v1007 = vpop.f32.mrf.mxu0
    %v1008 = vadd.f32 %v919, %v1007
    %1009 = vmatmul.bf16.gmra.mxu0 %v324
    %v1010 = vpop.f32.mrf.mxu0
    %v1011 = vadd.f32 %v922, %v1010
    %v1012 = vpop.f32.mrf.mxu0
    %v1013 = vadd.f32 %v924, %v1012
    %1014 = vmatmul.bf16.gmra.mxu0 %v326
    %v1015 = vpop.f32.mrf.mxu0
    %v1016 = vadd.f32 %v927, %v1015
    %v1017 = vpop.f32.mrf.mxu0
    %v1018 = vadd.f32 %v929, %v1017
    %1019 = vmatmul.bf16.gmra.mxu0 %v328
    %v1020 = vpop.f32.mrf.mxu0
    %v1021 = vadd.f32 %v932, %v1020
    %v1022 = vpop.f32.mrf.mxu0
    %v1023 = vadd.f32 %v934, %v1022
    %1024 = vmatmul.bf16.gmra.mxu0 %v330
    %v1025 = vpop.f32.mrf.mxu0
    %v1026 = vadd.f32 %v937, %v1025
    %v1027 = vpop.f32.mrf.mxu0
    %v1028 = vadd.f32 %v939, %v1027
    %1029 = vmatmul.bf16.gmra.mxu0 %v332
    %v1030 = vpop.f32.mrf.mxu0
    %v1031 = vadd.f32 %v942, %v1030
    %v1032 = vpop.f32.mrf.mxu0
    %v1033 = vadd.f32 %v944, %v1032
    %1034 = vmatmul.bf16.gmra.mxu0 %v334
    %v1035 = vpop.f32.mrf.mxu0
    %v1036 = vadd.f32 %v947, %v1035
    %v1037 = vpop.f32.mrf.mxu0
    %v1038 = vadd.f32 %v949, %v1037
    %1039 = vmatmul.bf16.gmra.mxu0 %v336
    %v1040 = vpop.f32.mrf.mxu0
    %v1041 = vadd.f32 %v952, %v1040
    %v1042 = vpop.f32.mrf.mxu0
    %v1043 = vadd.f32 %v954, %v1042
    %1044 = vdwg.mxu0
    %1045 = vmatpush.bf16.msra.mxu0 %v591
    %1046 = vmatpush.bf16.msra.mxu0 %v587
    %1047 = vmatpush.bf16.msra.mxu0 %v583
    %1048 = vmatpush.bf16.msra.mxu0 %v579
    %1049 = vmatpush.bf16.msra.mxu0 %v575
    %1050 = vmatpush.bf16.msra.mxu0 %v571
    %1051 = vmatpush.bf16.msra.mxu0 %v567
    %1052 = vmatpush.bf16.msra.mxu0 %v563
    %1053 = vmatmul.bf16.gmra.mxu0 %v305
    %v1054 = vpop.f32.mrf.mxu0
    %v1055 = vadd.f32 %v203, %v1054
    %v1056 = vpop.f32.mrf.mxu0
    %v1057 = vadd.f32 %v203, %v1056
    %1058 = vmatmul.bf16.gmra.mxu0 %v307
    %v1059 = vpop.f32.mrf.mxu0
    %v1060 = vadd.f32 %v203, %v1059
    %v1061 = vpop.f32.mrf.mxu0
    %v1062 = vadd.f32 %v203, %v1061
    %1063 = vmatmul.bf16.gmra.mxu0 %v309
    %v1064 = vpop.f32.mrf.mxu0
    %v1065 = vadd.f32 %v203, %v1064
    %v1066 = vpop.f32.mrf.mxu0
    %v1067 = vadd.f32 %v203, %v1066
    %1068 = vmatmul.bf16.gmra.mxu0 %v311
    %v1069 = vpop.f32.mrf.mxu0
    %v1070 = vadd.f32 %v203, %v1069
    %v1071 = vpop.f32.mrf.mxu0
    %v1072 = vadd.f32 %v203, %v1071
    %1073 = vmatmul.bf16.gmra.mxu0 %v313
    %v1074 = vpop.f32.mrf.mxu0
    %v1075 = vadd.f32 %v203, %v1074
    %v1076 = vpop.f32.mrf.mxu0
    %v1077 = vadd.f32 %v203, %v1076
    %1078 = vmatmul.bf16.gmra.mxu0 %v315
    %v1079 = vpop.f32.mrf.mxu0
    %v1080 = vadd.f32 %v203, %v1079
    %v1081 = vpop.f32.mrf.mxu0
    %v1082 = vadd.f32 %v203, %v1081
    %1083 = vmatmul.bf16.gmra.mxu0 %v317
    %v1084 = vpop.f32.mrf.mxu0
    %v1085 = vadd.f32 %v203, %v1084
    %v1086 = vpop.f32.mrf.mxu0
    %v1087 = vadd.f32 %v203, %v1086
    %1088 = vmatmul.bf16.gmra.mxu0 %v319
    %v1089 = vpop.f32.mrf.mxu0
    %v1090 = vadd.f32 %v203, %v1089
    %v1091 = vpop.f32.mrf.mxu0
    %v1092 = vadd.f32 %v203, %v1091
    %1093 = vmatmul.bf16.gmra.mxu0 %v321
    %v1094 = vpop.f32.mrf.mxu0
    %v1095 = vadd.f32 %v203, %v1094
    %v1096 = vpop.f32.mrf.mxu0
    %v1097 = vadd.f32 %v203, %v1096
    %1098 = vmatmul.bf16.gmra.mxu0 %v323
    %v1099 = vpop.f32.mrf.mxu0
    %v1100 = vadd.f32 %v203, %v1099
    %v1101 = vpop.f32.mrf.mxu0
    %v1102 = vadd.f32 %v203, %v1101
    %1103 = vmatmul.bf16.gmra.mxu0 %v325
    %v1104 = vpop.f32.mrf.mxu0
    %v1105 = vadd.f32 %v203, %v1104
    %v1106 = vpop.f32.mrf.mxu0
    %v1107 = vadd.f32 %v203, %v1106
    %1108 = vmatmul.bf16.gmra.mxu0 %v327
    %v1109 = vpop.f32.mrf.mxu0
    %v1110 = vadd.f32 %v203, %v1109
    %v1111 = vpop.f32.mrf.mxu0
    %v1112 = vadd.f32 %v203, %v1111
    %1113 = vmatmul.bf16.gmra.mxu0 %v329
    %v1114 = vpop.f32.mrf.mxu0
    %v1115 = vadd.f32 %v203, %v1114
    %v1116 = vpop.f32.mrf.mxu0
    %v1117 = vadd.f32 %v203, %v1116
    %1118 = vmatmul.bf16.gmra.mxu0 %v331
    %v1119 = vpop.f32.mrf.mxu0
    %v1120 = vadd.f32 %v203, %v1119
    %v1121 = vpop.f32.mrf.mxu0
    %v1122 = vadd.f32 %v203, %v1121
    %1123 = vmatmul.bf16.gmra.mxu0 %v333
    %v1124 = vpop.f32.mrf.mxu0
    %v1125 = vadd.f32 %v203, %v1124
    %v1126 = vpop.f32.mrf.mxu0
    %v1127 = vadd.f32 %v203, %v1126
    %1128 = vmatmul.bf16.gmra.mxu0 %v335
    %v1129 = vpop.f32.mrf.mxu0
    %v1130 = vadd.f32 %v203, %v1129
    %v1131 = vpop.f32.mrf.mxu0
    %v1132 = vadd.f32 %v203, %v1131
    %1133 = vdwg.mxu0
    %1134 = vmatpush.bf16.msra.mxu0 %v623
    %1135 = vmatpush.bf16.msra.mxu0 %v619
    %1136 = vmatpush.bf16.msra.mxu0 %v615
    %1137 = vmatpush.bf16.msra.mxu0 %v611
    %1138 = vmatpush.bf16.msra.mxu0 %v607
    %1139 = vmatpush.bf16.msra.mxu0 %v603
    %1140 = vmatpush.bf16.msra.mxu0 %v599
    %1141 = vmatpush.bf16.msra.mxu0 %v595
    %1142 = vmatmul.bf16.gmra.mxu0 %v306
    %v1143 = vpop.f32.mrf.mxu0
    %v1144 = vadd.f32 %v1055, %v1143
    %v1145 = vpop.f32.mrf.mxu0
    %v1146 = vadd.f32 %v1057, %v1145
    %1147 = vmatmul.bf16.gmra.mxu0 %v308
    %v1148 = vpop.f32.mrf.mxu0
    %v1149 = vadd.f32 %v1060, %v1148
    %v1150 = vpop.f32.mrf.mxu0
    %v1151 = vadd.f32 %v1062, %v1150
    %1152 = vmatmul.bf16.gmra.mxu0 %v310
    %v1153 = vpop.f32.mrf.mxu0
    %v1154 = vadd.f32 %v1065, %v1153
    %v1155 = vpop.f32.mrf.mxu0
    %v1156 = vadd.f32 %v1067, %v1155
    %1157 = vmatmul.bf16.gmra.mxu0 %v312
    %v1158 = vpop.f32.mrf.mxu0
    %v1159 = vadd.f32 %v1070, %v1158
    %v1160 = vpop.f32.mrf.mxu0
    %v1161 = vadd.f32 %v1072, %v1160
    %1162 = vmatmul.bf16.gmra.mxu0 %v314
    %v1163 = vpop.f32.mrf.mxu0
    %v1164 = vadd.f32 %v1075, %v1163
    %v1165 = vpop.f32.mrf.mxu0
    %v1166 = vadd.f32 %v1077, %v1165
    %1167 = vmatmul.bf16.gmra.mxu0 %v316
    %v1168 = vpop.f32.mrf.mxu0
    %v1169 = vadd.f32 %v1080, %v1168
    %v1170 = vpop.f32.mrf.mxu0
    %v1171 = vadd.f32 %v1082, %v1170
    %1172 = vmatmul.bf16.gmra.mxu0 %v318
    %v1173 = vpop.f32.mrf.mxu0
    %v1174 = vadd.f32 %v1085, %v1173
    %v1175 = vpop.f32.mrf.mxu0
    %v1176 = vadd.f32 %v1087, %v1175
    %1177 = vmatmul.bf16.gmra.mxu0 %v320
    %v1178 = vpop.f32.mrf.mxu0
    %v1179 = vadd.f32 %v1090, %v1178
    %v1180 = vpop.f32.mrf.mxu0
    %v1181 = vadd.f32 %v1092, %v1180
    %1182 = vmatmul.bf16.gmra.mxu0 %v322
    %v1183 = vpop.f32.mrf.mxu0
    %v1184 = vadd.f32 %v1095, %v1183
    %v1185 = vpop.f32.mrf.mxu0
    %v1186 = vadd.f32 %v1097, %v1185
    %1187 = vmatmul.bf16.gmra.mxu0 %v324
    %v1188 = vpop.f32.mrf.mxu0
    %v1189 = vadd.f32 %v1100, %v1188
    %v1190 = vpop.f32.mrf.mxu0
    %v1191 = vadd.f32 %v1102, %v1190
    %1192 = vmatmul.bf16.gmra.mxu0 %v326
    %v1193 = vpop.f32.mrf.mxu0
    %v1194 = vadd.f32 %v1105, %v1193
    %v1195 = vpop.f32.mrf.mxu0
    %v1196 = vadd.f32 %v1107, %v1195
    %1197 = vmatmul.bf16.gmra.mxu0 %v328
    %v1198 = vpop.f32.mrf.mxu0
    %v1199 = vadd.f32 %v1110, %v1198
    %v1200 = vpop.f32.mrf.mxu0
    %v1201 = vadd.f32 %v1112, %v1200
    %1202 = vmatmul.bf16.gmra.mxu0 %v330
    %v1203 = vpop.f32.mrf.mxu0
    %v1204 = vadd.f32 %v1115, %v1203
    %v1205 = vpop.f32.mrf.mxu0
    %v1206 = vadd.f32 %v1117, %v1205
    %1207 = vmatmul.bf16.gmra.mxu0 %v332
    %v1208 = vpop.f32.mrf.mxu0
    %v1209 = vadd.f32 %v1120, %v1208
    %v1210 = vpop.f32.mrf.mxu0
    %v1211 = vadd.f32 %v1122, %v1210
    %1212 = vmatmul.bf16.gmra.mxu0 %v334
    %v1213 = vpop.f32.mrf.mxu0
    %v1214 = vadd.f32 %v1125, %v1213
    %v1215 = vpop.f32.mrf.mxu0
    %v1216 = vadd.f32 %v1127, %v1215
    %1217 = vmatmul.bf16.gmra.mxu0 %v336
    %v1218 = vpop.f32.mrf.mxu0
    %v1219 = vadd.f32 %v1130, %v1218
    %v1220 = vpop.f32.mrf.mxu0
    %v1221 = vadd.f32 %v1132, %v1220
    %1222 = vdwg.mxu0
    %1223 = vmatpush.bf16.msra.mxu0 %v592
    %1224 = vmatpush.bf16.msra.mxu0 %v588
    %1225 = vmatpush.bf16.msra.mxu0 %v584
    %1226 = vmatpush.bf16.msra.mxu0 %v580
    %1227 = vmatpush.bf16.msra.mxu0 %v576
    %1228 = vmatpush.bf16.msra.mxu0 %v572
    %1229 = vmatpush.bf16.msra.mxu0 %v568
    %1230 = vmatpush.bf16.msra.mxu0 %v564
    %1231 = vmatmul.bf16.gmra.mxu0 %v305
    %v1232 = vpop.f32.mrf.mxu0
    %v1233 = vadd.f32 %v204, %v1232
    %v1234 = vpop.f32.mrf.mxu0
    %v1235 = vadd.f32 %v204, %v1234
    %1236 = vmatmul.bf16.gmra.mxu0 %v307
    %v1237 = vpop.f32.mrf.mxu0
    %v1238 = vadd.f32 %v204, %v1237
    %v1239 = vpop.f32.mrf.mxu0
    %v1240 = vadd.f32 %v204, %v1239
    %1241 = vmatmul.bf16.gmra.mxu0 %v309
    %v1242 = vpop.f32.mrf.mxu0
    %v1243 = vadd.f32 %v204, %v1242
    %v1244 = vpop.f32.mrf.mxu0
    %v1245 = vadd.f32 %v204, %v1244
    %1246 = vmatmul.bf16.gmra.mxu0 %v311
    %v1247 = vpop.f32.mrf.mxu0
    %v1248 = vadd.f32 %v204, %v1247
    %v1249 = vpop.f32.mrf.mxu0
    %v1250 = vadd.f32 %v204, %v1249
    %1251 = vmatmul.bf16.gmra.mxu0 %v313
    %v1252 = vpop.f32.mrf.mxu0
    %v1253 = vadd.f32 %v204, %v1252
    %v1254 = vpop.f32.mrf.mxu0
    %v1255 = vadd.f32 %v204, %v1254
    %1256 = vmatmul.bf16.gmra.mxu0 %v315
    %v1257 = vpop.f32.mrf.mxu0
    %v1258 = vadd.f32 %v204, %v1257
    %v1259 = vpop.f32.mrf.mxu0
    %v1260 = vadd.f32 %v204, %v1259
    %1261 = vmatmul.bf16.gmra.mxu0 %v317
    %v1262 = vpop.f32.mrf.mxu0
    %v1263 = vadd.f32 %v204, %v1262
    %v1264 = vpop.f32.mrf.mxu0
    %v1265 = vadd.f32 %v204, %v1264
    %1266 = vmatmul.bf16.gmra.mxu0 %v319
    %v1267 = vpop.f32.mrf.mxu0
    %v1268 = vadd.f32 %v204, %v1267
    %v1269 = vpop.f32.mrf.mxu0
    %v1270 = vadd.f32 %v204, %v1269
    %1271 = vmatmul.bf16.gmra.mxu0 %v321
    %v1272 = vpop.f32.mrf.mxu0
    %v1273 = vadd.f32 %v204, %v1272
    %v1274 = vpop.f32.mrf.mxu0
    %v1275 = vadd.f32 %v204, %v1274
    %1276 = vmatmul.bf16.gmra.mxu0 %v323
    %v1277 = vpop.f32.mrf.mxu0
    %v1278 = vadd.f32 %v204, %v1277
    %v1279 = vpop.f32.mrf.mxu0
    %v1280 = vadd.f32 %v204, %v1279
    %1281 = vmatmul.bf16.gmra.mxu0 %v325
    %v1282 = vpop.f32.mrf.mxu0
    %v1283 = vadd.f32 %v204, %v1282
    %v1284 = vpop.f32.mrf.mxu0
    %v1285 = vadd.f32 %v204, %v1284
    %1286 = vmatmul.bf16.gmra.mxu0 %v327
    %v1287 = vpop.f32.mrf.mxu0
    %v1288 = vadd.f32 %v204, %v1287
    %v1289 = vpop.f32.mrf.mxu0
    %v1290 = vadd.f32 %v204, %v1289
    %1291 = vmatmul.bf16.gmra.mxu0 %v329
    %v1292 = vpop.f32.mrf.mxu0
    %v1293 = vadd.f32 %v204, %v1292
    %v1294 = vpop.f32.mrf.mxu0
    %v1295 = vadd.f32 %v204, %v1294
    %1296 = vmatmul.bf16.gmra.mxu0 %v331
    %v1297 = vpop.f32.mrf.mxu0
    %v1298 = vadd.f32 %v204, %v1297
    %v1299 = vpop.f32.mrf.mxu0
    %v1300 = vadd.f32 %v204, %v1299
    %1301 = vmatmul.bf16.gmra.mxu0 %v333
    %v1302 = vpop.f32.mrf.mxu0
    %v1303 = vadd.f32 %v204, %v1302
    %v1304 = vpop.f32.mrf.mxu0
    %v1305 = vadd.f32 %v204, %v1304
    %1306 = vmatmul.bf16.gmra.mxu0 %v335
    %v1307 = vpop.f32.mrf.mxu0
    %v1308 = vadd.f32 %v204, %v1307
    %v1309 = vpop.f32.mrf.mxu0
    %v1310 = vadd.f32 %v204, %v1309
    %1311 = vdwg.mxu0
    %1312 = vmatpush.bf16.msra.mxu0 %v624
    %1313 = vmatpush.bf16.msra.mxu0 %v620
    %1314 = vmatpush.bf16.msra.mxu0 %v616
    %1315 = vmatpush.bf16.msra.mxu0 %v612
    %1316 = vmatpush.bf16.msra.mxu0 %v608
    %1317 = vmatpush.bf16.msra.mxu0 %v604
    %1318 = vmatpush.bf16.msra.mxu0 %v600
    %1319 = vmatpush.bf16.msra.mxu0 %v596
    %1320 = vmatmul.bf16.gmra.mxu0 %v306
    %v1321 = vpop.f32.mrf.mxu0
    %v1322 = vadd.f32 %v1233, %v1321
    %v1323 = vpop.f32.mrf.mxu0
    %v1324 = vadd.f32 %v1235, %v1323
    %1325 = vmatmul.bf16.gmra.mxu0 %v308
    %v1326 = vpop.f32.mrf.mxu0
    %v1327 = vadd.f32 %v1238, %v1326
    %v1328 = vpop.f32.mrf.mxu0
    %v1329 = vadd.f32 %v1240, %v1328
    %1330 = vmatmul.bf16.gmra.mxu0 %v310
    %v1331 = vpop.f32.mrf.mxu0
    %v1332 = vadd.f32 %v1243, %v1331
    %v1333 = vpop.f32.mrf.mxu0
    %v1334 = vadd.f32 %v1245, %v1333
    %1335 = vmatmul.bf16.gmra.mxu0 %v312
    %v1336 = vpop.f32.mrf.mxu0
    %v1337 = vadd.f32 %v1248, %v1336
    %v1338 = vpop.f32.mrf.mxu0
    %v1339 = vadd.f32 %v1250, %v1338
    %1340 = vmatmul.bf16.gmra.mxu0 %v314
    %v1341 = vpop.f32.mrf.mxu0
    %v1342 = vadd.f32 %v1253, %v1341
    %v1343 = vpop.f32.mrf.mxu0
    %v1344 = vadd.f32 %v1255, %v1343
    %1345 = vmatmul.bf16.gmra.mxu0 %v316
    %v1346 = vpop.f32.mrf.mxu0
    %v1347 = vadd.f32 %v1258, %v1346
    %v1348 = vpop.f32.mrf.mxu0
    %v1349 = vadd.f32 %v1260, %v1348
    %1350 = vmatmul.bf16.gmra.mxu0 %v318
    %v1351 = vpop.f32.mrf.mxu0
    %v1352 = vadd.f32 %v1263, %v1351
    %v1353 = vpop.f32.mrf.mxu0
    %v1354 = vadd.f32 %v1265, %v1353
    %1355 = vmatmul.bf16.gmra.mxu0 %v320
    %v1356 = vpop.f32.mrf.mxu0
    %v1357 = vadd.f32 %v1268, %v1356
    %v1358 = vpop.f32.mrf.mxu0
    %v1359 = vadd.f32 %v1270, %v1358
    %1360 = vmatmul.bf16.gmra.mxu0 %v322
    %v1361 = vpop.f32.mrf.mxu0
    %v1362 = vadd.f32 %v1273, %v1361
    %v1363 = vpop.f32.mrf.mxu0
    %v1364 = vadd.f32 %v1275, %v1363
    %1365 = vmatmul.bf16.gmra.mxu0 %v324
    %v1366 = vpop.f32.mrf.mxu0
    %v1367 = vadd.f32 %v1278, %v1366
    %v1368 = vpop.f32.mrf.mxu0
    %v1369 = vadd.f32 %v1280, %v1368
    %1370 = vmatmul.bf16.gmra.mxu0 %v326
    %v1371 = vpop.f32.mrf.mxu0
    %v1372 = vadd.f32 %v1283, %v1371
    %v1373 = vpop.f32.mrf.mxu0
    %v1374 = vadd.f32 %v1285, %v1373
    %1375 = vmatmul.bf16.gmra.mxu0 %v328
    %v1376 = vpop.f32.mrf.mxu0
    %v1377 = vadd.f32 %v1288, %v1376
    %v1378 = vpop.f32.mrf.mxu0
    %v1379 = vadd.f32 %v1290, %v1378
    %1380 = vmatmul.bf16.gmra.mxu0 %v330
    %v1381 = vpop.f32.mrf.mxu0
    %v1382 = vadd.f32 %v1293, %v1381
    %v1383 = vpop.f32.mrf.mxu0
    %v1384 = vadd.f32 %v1295, %v1383
    %1385 = vmatmul.bf16.gmra.mxu0 %v332
    %v1386 = vpop.f32.mrf.mxu0
    %v1387 = vadd.f32 %v1298, %v1386
    %v1388 = vpop.f32.mrf.mxu0
    %v1389 = vadd.f32 %v1300, %v1388
    %1390 = vmatmul.bf16.gmra.mxu0 %v334
    %v1391 = vpop.f32.mrf.mxu0
    %v1392 = vadd.f32 %v1303, %v1391
    %v1393 = vpop.f32.mrf.mxu0
    %v1394 = vadd.f32 %v1305, %v1393
    %1395 = vmatmul.bf16.gmra.mxu0 %v336
    %v1396 = vpop.f32.mrf.mxu0
    %v1397 = vadd.f32 %v1308, %v1396
    %v1398 = vpop.f32.mrf.mxu0
    %v1399 = vadd.f32 %v1310, %v1398
    %1400 = vdwg.mxu0
    %v1401 = vmax.f32 %v788, 0.0
    %v1402 = vmax.f32 %v966, 0.0
    %v1403 = vmax.f32 %v1144, 0.0
    %v1404 = vmax.f32 %v1322, 0.0
    %v1405 = vmax.f32 %v790, 0.0
    %v1406 = vmax.f32 %v968, 0.0
    %v1407 = vmax.f32 %v1146, 0.0
    %v1408 = vmax.f32 %v1324, 0.0
    %v1409 = vmax.f32 %v793, 0.0
    %v1410 = vmax.f32 %v971, 0.0
    %v1411 = vmax.f32 %v1149, 0.0
    %v1412 = vmax.f32 %v1327, 0.0
    %v1413 = vmax.f32 %v795, 0.0
    %v1414 = vmax.f32 %v973, 0.0
    %v1415 = vmax.f32 %v1151, 0.0
    %v1416 = vmax.f32 %v1329, 0.0
    %v1417 = vmax.f32 %v798, 0.0
    %v1418 = vmax.f32 %v976, 0.0
    %v1419 = vmax.f32 %v1154, 0.0
    %v1420 = vmax.f32 %v1332, 0.0
    %v1421 = vmax.f32 %v800, 0.0
    %v1422 = vmax.f32 %v978, 0.0
    %v1423 = vmax.f32 %v1156, 0.0
    %v1424 = vmax.f32 %v1334, 0.0
    %v1425 = vmax.f32 %v803, 0.0
    %v1426 = vmax.f32 %v981, 0.0
    %v1427 = vmax.f32 %v1159, 0.0
    %v1428 = vmax.f32 %v1337, 0.0
    %v1429 = vmax.f32 %v805, 0.0
    %v1430 = vmax.f32 %v983, 0.0
    %v1431 = vmax.f32 %v1161, 0.0
    %v1432 = vmax.f32 %v1339, 0.0
    %v1433 = vmax.f32 %v808, 0.0
    %v1434 = vmax.f32 %v986, 0.0
    %v1435 = vmax.f32 %v1164, 0.0
    %v1436 = vmax.f32 %v1342, 0.0
    %v1437 = vmax.f32 %v810, 0.0
    %v1438 = vmax.f32 %v988, 0.0
    %v1439 = vmax.f32 %v1166, 0.0
    %v1440 = vmax.f32 %v1344, 0.0
    %v1441 = vmax.f32 %v813, 0.0
    %v1442 = vmax.f32 %v991, 0.0
    %v1443 = vmax.f32 %v1169, 0.0
    %v1444 = vmax.f32 %v1347, 0.0
    %v1445 = vmax.f32 %v815, 0.0
    %v1446 = vmax.f32 %v993, 0.0
    %v1447 = vmax.f32 %v1171, 0.0
    %v1448 = vmax.f32 %v1349, 0.0
    %v1449 = vmax.f32 %v818, 0.0
    %v1450 = vmax.f32 %v996, 0.0
    %v1451 = vmax.f32 %v1174, 0.0
    %v1452 = vmax.f32 %v1352, 0.0
    %v1453 = vmax.f32 %v820, 0.0
    %v1454 = vmax.f32 %v998, 0.0
    %v1455 = vmax.f32 %v1176, 0.0
    %v1456 = vmax.f32 %v1354, 0.0
    %v1457 = vmax.f32 %v823, 0.0
    %v1458 = vmax.f32 %v1001, 0.0
    %v1459 = vmax.f32 %v1179, 0.0
    %v1460 = vmax.f32 %v1357, 0.0
    %v1461 = vmax.f32 %v825, 0.0
    %v1462 = vmax.f32 %v1003, 0.0
    %v1463 = vmax.f32 %v1181, 0.0
    %v1464 = vmax.f32 %v1359, 0.0
    %v1465 = vmax.f32 %v828, 0.0
    %v1466 = vmax.f32 %v1006, 0.0
    %v1467 = vmax.f32 %v1184, 0.0
    %v1468 = vmax.f32 %v1362, 0.0
    %v1469 = vmax.f32 %v830, 0.0
    %v1470 = vmax.f32 %v1008, 0.0
    %v1471 = vmax.f32 %v1186, 0.0
    %v1472 = vmax.f32 %v1364, 0.0
    %v1473 = vmax.f32 %v833, 0.0
    %v1474 = vmax.f32 %v1011, 0.0
    %v1475 = vmax.f32 %v1189, 0.0
    %v1476 = vmax.f32 %v1367, 0.0
    %v1477 = vmax.f32 %v835, 0.0
    %v1478 = vmax.f32 %v1013, 0.0
    %v1479 = vmax.f32 %v1191, 0.0
    %v1480 = vmax.f32 %v1369, 0.0
    %v1481 = vmax.f32 %v838, 0.0
    %v1482 = vmax.f32 %v1016, 0.0
    %v1483 = vmax.f32 %v1194, 0.0
    %v1484 = vmax.f32 %v1372, 0.0
    %v1485 = vmax.f32 %v840, 0.0
    %v1486 = vmax.f32 %v1018, 0.0
    %v1487 = vmax.f32 %v1196, 0.0
    %v1488 = vmax.f32 %v1374, 0.0
    %v1489 = vmax.f32 %v843, 0.0
    %v1490 = vmax.f32 %v1021, 0.0
    %v1491 = vmax.f32 %v1199, 0.0
    %v1492 = vmax.f32 %v1377, 0.0
    %v1493 = vmax.f32 %v845, 0.0
    %v1494 = vmax.f32 %v1023, 0.0
    %v1495 = vmax.f32 %v1201, 0.0
    %v1496 = vmax.f32 %v1379, 0.0
    %v1497 = vmax.f32 %v848, 0.0
    %v1498 = vmax.f32 %v1026, 0.0
    %v1499 = vmax.f32 %v1204, 0.0
    %v1500 = vmax.f32 %v1382, 0.0
    %v1501 = vmax.f32 %v850, 0.0
    %v1502 = vmax.f32 %v1028, 0.0
    %v1503 = vmax.f32 %v1206, 0.0
    %v1504 = vmax.f32 %v1384, 0.0
    %v1505 = vmax.f32 %v853, 0.0
    %v1506 = vmax.f32 %v1031, 0.0
    %v1507 = vmax.f32 %v1209, 0.0
    %v1508 = vmax.f32 %v1387, 0.0
    %v1509 = vmax.f32 %v855, 0.0
    %v1510 = vmax.f32 %v1033, 0.0
    %v1511 = vmax.f32 %v1211, 0.0
    %v1512 = vmax.f32 %v1389, 0.0
    %v1513 = vmax.f32 %v858, 0.0
    %v1514 = vmax.f32 %v1036, 0.0
    %v1515 = vmax.f32 %v1214, 0.0
    %v1516 = vmax.f32 %v1392, 0.0
    %v1517 = vmax.f32 %v860, 0.0
    %v1518 = vmax.f32 %v1038, 0.0
    %v1519 = vmax.f32 %v1216, 0.0
    %v1520 = vmax.f32 %v1394, 0.0
    %v1521 = vmax.f32 %v863, 0.0
    %v1522 = vmax.f32 %v1041, 0.0
    %v1523 = vmax.f32 %v1219, 0.0
    %v1524 = vmax.f32 %v1397, 0.0
    %v1525 = vmax.f32 %v865, 0.0
    %v1526 = vmax.f32 %v1043, 0.0
    %v1527 = vmax.f32 %v1221, 0.0
    %v1528 = vmax.f32 %v1399, 0.0
    %v1529 = vpack.c.bf16 %v1405, %v1401
    %v1530 = vpack.c.bf16 %v1406, %v1402
    %v1531 = vpack.c.bf16 %v1407, %v1403
    %v1532 = vpack.c.bf16 %v1408, %v1404
    %v1533 = vpack.c.bf16 %v1413, %v1409
    %v1534 = vpack.c.bf16 %v1414, %v1410
    %v1535 = vpack.c.bf16 %v1415, %v1411
    %v1536 = vpack.c.bf16 %v1416, %v1412
    %v1537 = vpack.c.bf16 %v1421, %v1417
    %v1538 = vpack.c.bf16 %v1422, %v1418
    %v1539 = vpack.c.bf16 %v1423, %v1419
    %v1540 = vpack.c.bf16 %v1424, %v1420
    %v1541 = vpack.c.bf16 %v1429, %v1425
    %v1542 = vpack.c.bf16 %v1430, %v1426
    %v1543 = vpack.c.bf16 %v1431, %v1427
    %v1544 = vpack.c.bf16 %v1432, %v1428
    %v1545 = vpack.c.bf16 %v1437, %v1433
    %v1546 = vpack.c.bf16 %v1438, %v1434
    %v1547 = vpack.c.bf16 %v1439, %v1435
    %v1548 = vpack.c.bf16 %v1440, %v1436
    %v1549 = vpack.c.bf16 %v1445, %v1441
    %v1550 = vpack.c.bf16 %v1446, %v1442
    %v1551 = vpack.c.bf16 %v1447, %v1443
    %v1552 = vpack.c.bf16 %v1448, %v1444
    %v1553 = vpack.c.bf16 %v1453, %v1449
    %v1554 = vpack.c.bf16 %v1454, %v1450
    %v1555 = vpack.c.bf16 %v1455, %v1451
    %v1556 = vpack.c.bf16 %v1456, %v1452
    %v1557 = vpack.c.bf16 %v1461, %v1457
    %v1558 = vpack.c.bf16 %v1462, %v1458
    %v1559 = vpack.c.bf16 %v1463, %v1459
    %v1560 = vpack.c.bf16 %v1464, %v1460
    %v1561 = vpack.c.bf16 %v1469, %v1465
    %v1562 = vpack.c.bf16 %v1470, %v1466
    %v1563 = vpack.c.bf16 %v1471, %v1467
    %v1564 = vpack.c.bf16 %v1472, %v1468
    %v1565 = vpack.c.bf16 %v1477, %v1473
    %v1566 = vpack.c.bf16 %v1478, %v1474
    %v1567 = vpack.c.bf16 %v1479, %v1475
    %v1568 = vpack.c.bf16 %v1480, %v1476
    %v1569 = vpack.c.bf16 %v1485, %v1481
    %v1570 = vpack.c.bf16 %v1486, %v1482
    %v1571 = vpack.c.bf16 %v1487, %v1483
    %v1572 = vpack.c.bf16 %v1488, %v1484
    %v1573 = vpack.c.bf16 %v1493, %v1489
    %v1574 = vpack.c.bf16 %v1494, %v1490
    %v1575 = vpack.c.bf16 %v1495, %v1491
    %v1576 = vpack.c.bf16 %v1496, %v1492
    %v1577 = vpack.c.bf16 %v1501, %v1497
    %v1578 = vpack.c.bf16 %v1502, %v1498
    %v1579 = vpack.c.bf16 %v1503, %v1499
    %v1580 = vpack.c.bf16 %v1504, %v1500
    %v1581 = vpack.c.bf16 %v1509, %v1505
    %v1582 = vpack.c.bf16 %v1510, %v1506
    %v1583 = vpack.c.bf16 %v1511, %v1507
    %v1584 = vpack.c.bf16 %v1512, %v1508
    %v1585 = vpack.c.bf16 %v1517, %v1513
    %v1586 = vpack.c.bf16 %v1518, %v1514
    %v1587 = vpack.c.bf16 %v1519, %v1515
    %v1588 = vpack.c.bf16 %v1520, %v1516
    %v1589 = vpack.c.bf16 %v1525, %v1521
    %v1590 = vpack.c.bf16 %v1526, %v1522
    %v1591 = vpack.c.bf16 %v1527, %v1523
    %v1592 = vpack.c.bf16 %v1528, %v1524
    %v1593 = vld [vmem:[#allocation8] sm:$0xf]
    %v1594 = vld [vmem:[#allocation8 + $0x4] sm:$0xf]
    %v1595 = vld [vmem:[#allocation8 + $0x8] sm:$0xf]
    %v1596 = vld [vmem:[#allocation8 + $0xc] sm:$0xf]
    %v1597 = vld [vmem:[#allocation8 + $0x10] sm:$0xf]
    %v1598 = vld [vmem:[#allocation8 + $0x14] sm:$0xf]
    %v1599 = vld [vmem:[#allocation8 + $0x18] sm:$0xf]
    %v1600 = vld [vmem:[#allocation8 + $0x1c] sm:$0xf]
    %v1601 = vld [vmem:[#allocation8 + $0x20] sm:$0xf]
    %v1602 = vld [vmem:[#allocation8 + $0x24] sm:$0xf]
    %v1603 = vld [vmem:[#allocation8 + $0x28] sm:$0xf]
    %v1604 = vld [vmem:[#allocation8 + $0x2c] sm:$0xf]
    %v1605 = vld [vmem:[#allocation8 + $0x30] sm:$0xf]
    %v1606 = vld [vmem:[#allocation8 + $0x34] sm:$0xf]
    %v1607 = vld [vmem:[#allocation8 + $0x38] sm:$0xf]
    %v1608 = vld [vmem:[#allocation8 + $0x3c] sm:$0xf]
    %v1609 = vld [vmem:[#allocation8 + $0x40] sm:$0xf]
    %v1610 = vld [vmem:[#allocation8 + $0x44] sm:$0xf]
    %v1611 = vld [vmem:[#allocation8 + $0x48] sm:$0xf]
    %v1612 = vld [vmem:[#allocation8 + $0x4c] sm:$0xf]
    %v1613 = vld [vmem:[#allocation8 + $0x50] sm:$0xf]
    %v1614 = vld [vmem:[#allocation8 + $0x54] sm:$0xf]
    %v1615 = vld [vmem:[#allocation8 + $0x58] sm:$0xf]
    %v1616 = vld [vmem:[#allocation8 + $0x5c] sm:$0xf]
    %v1617 = vld [vmem:[#allocation8 + $0x60] sm:$0xf]
    %v1618 = vld [vmem:[#allocation8 + $0x64] sm:$0xf]
    %v1619 = vld [vmem:[#allocation8 + $0x68] sm:$0xf]
    %v1620 = vld [vmem:[#allocation8 + $0x6c] sm:$0xf]
    %v1621 = vld [vmem:[#allocation8 + $0x70] sm:$0xf]
    %v1622 = vld [vmem:[#allocation8 + $0x74] sm:$0xf]
    %v1623 = vld [vmem:[#allocation8 + $0x78] sm:$0xf]
    %v1624 = vld [vmem:[#allocation8 + $0x7c] sm:$0xf]
    %v1625 = vld [vmem:[#allocation8 + $0x80] sm:$0xf]
    %v1626 = vld [vmem:[#allocation8 + $0x84] sm:$0xf]
    %v1627 = vld [vmem:[#allocation8 + $0x88] sm:$0xf]
    %v1628 = vld [vmem:[#allocation8 + $0x8c] sm:$0xf]
    %v1629 = vld [vmem:[#allocation8 + $0x90] sm:$0xf]
    %v1630 = vld [vmem:[#allocation8 + $0x94] sm:$0xf]
    %v1631 = vld [vmem:[#allocation8 + $0x98] sm:$0xf]
    %v1632 = vld [vmem:[#allocation8 + $0x9c] sm:$0xf]
    %v1633 = vld [vmem:[#allocation8 + $0xa0] sm:$0xf]
    %v1634 = vld [vmem:[#allocation8 + $0xa4] sm:$0xf]
    %v1635 = vld [vmem:[#allocation8 + $0xa8] sm:$0xf]
    %v1636 = vld [vmem:[#allocation8 + $0xac] sm:$0xf]
    %v1637 = vld [vmem:[#allocation8 + $0xb0] sm:$0xf]
    %v1638 = vld [vmem:[#allocation8 + $0xb4] sm:$0xf]
    %v1639 = vld [vmem:[#allocation8 + $0xb8] sm:$0xf]
    %v1640 = vld [vmem:[#allocation8 + $0xbc] sm:$0xf]
    %v1641 = vld [vmem:[#allocation8 + $0xc0] sm:$0xf]
    %v1642 = vld [vmem:[#allocation8 + $0xc4] sm:$0xf]
    %v1643 = vld [vmem:[#allocation8 + $0xc8] sm:$0xf]
    %v1644 = vld [vmem:[#allocation8 + $0xcc] sm:$0xf]
    %v1645 = vld [vmem:[#allocation8 + $0xd0] sm:$0xf]
    %v1646 = vld [vmem:[#allocation8 + $0xd4] sm:$0xf]
    %v1647 = vld [vmem:[#allocation8 + $0xd8] sm:$0xf]
    %v1648 = vld [vmem:[#allocation8 + $0xdc] sm:$0xf]
    %v1649 = vld [vmem:[#allocation8 + $0xe0] sm:$0xf]
    %v1650 = vld [vmem:[#allocation8 + $0xe4] sm:$0xf]
    %v1651 = vld [vmem:[#allocation8 + $0xe8] sm:$0xf]
    %v1652 = vld [vmem:[#allocation8 + $0xec] sm:$0xf]
    %v1653 = vld [vmem:[#allocation8 + $0xf0] sm:$0xf]
    %v1654 = vld [vmem:[#allocation8 + $0xf4] sm:$0xf]
    %v1655 = vld [vmem:[#allocation8 + $0xf8] sm:$0xf]
    %v1656 = vld [vmem:[#allocation8 + $0xfc] sm:$0xf]
    %v1657 = vld [vmem:[%s4] sm:$0x1]
    %v1659 = vperm.slane %v1657, 0
    %v1725 = vunpack.c.l.b16 %v1593
    %v1726 = vunpack.c.l.b16 %v1594
    %v1727 = vunpack.c.l.b16 %v1595
    %v1728 = vunpack.c.l.b16 %v1596
    %v1729 = vunpack.c.l.b16 %v1597
    %v1730 = vunpack.c.l.b16 %v1598
    %v1731 = vunpack.c.l.b16 %v1599
    %v1732 = vunpack.c.l.b16 %v1600
    %v1733 = vunpack.c.l.b16 %v1601
    %v1734 = vunpack.c.l.b16 %v1602
    %v1735 = vunpack.c.l.b16 %v1603
    %v1736 = vunpack.c.l.b16 %v1604
    %v1737 = vunpack.c.l.b16 %v1605
    %v1738 = vunpack.c.l.b16 %v1606
    %v1739 = vunpack.c.l.b16 %v1607
    %v1740 = vunpack.c.l.b16 %v1608
    %v1741 = vunpack.c.l.b16 %v1609
    %v1742 = vunpack.c.l.b16 %v1610
    %v1743 = vunpack.c.l.b16 %v1611
    %v1744 = vunpack.c.l.b16 %v1612
    %v1745 = vunpack.c.l.b16 %v1613
    %v1746 = vunpack.c.l.b16 %v1614
    %v1747 = vunpack.c.l.b16 %v1615
    %v1748 = vunpack.c.l.b16 %v1616
    %v1749 = vunpack.c.l.b16 %v1617
    %v1750 = vunpack.c.l.b16 %v1618
    %v1751 = vunpack.c.l.b16 %v1619
    %v1752 = vunpack.c.l.b16 %v1620
    %v1753 = vunpack.c.l.b16 %v1621
    %v1754 = vunpack.c.l.b16 %v1622
    %v1755 = vunpack.c.l.b16 %v1623
    %v1756 = vunpack.c.l.b16 %v1624
    %v1757 = vunpack.c.l.b16 %v1625
    %v1758 = vunpack.c.l.b16 %v1626
    %v1759 = vunpack.c.l.b16 %v1627
    %v1760 = vunpack.c.l.b16 %v1628
    %v1761 = vunpack.c.l.b16 %v1629
    %v1762 = vunpack.c.l.b16 %v1630
    %v1763 = vunpack.c.l.b16 %v1631
    %v1764 = vunpack.c.l.b16 %v1632
    %v1765 = vunpack.c.l.b16 %v1633
    %v1766 = vunpack.c.l.b16 %v1634
    %v1767 = vunpack.c.l.b16 %v1635
    %v1768 = vunpack.c.l.b16 %v1636
    %v1769 = vunpack.c.l.b16 %v1637
    %v1770 = vunpack.c.l.b16 %v1638
    %v1771 = vunpack.c.l.b16 %v1639
    %v1772 = vunpack.c.l.b16 %v1640
    %v1773 = vunpack.c.l.b16 %v1641
    %v1774 = vunpack.c.l.b16 %v1642
    %v1775 = vunpack.c.l.b16 %v1643
    %v1776 = vunpack.c.l.b16 %v1644
    %v1777 = vunpack.c.l.b16 %v1645
    %v1778 = vunpack.c.l.b16 %v1646
    %v1779 = vunpack.c.l.b16 %v1647
    %v1780 = vunpack.c.l.b16 %v1648
    %v1781 = vunpack.c.l.b16 %v1649
    %v1782 = vunpack.c.l.b16 %v1650
    %v1783 = vunpack.c.l.b16 %v1651
    %v1784 = vunpack.c.l.b16 %v1652
    %v1785 = vunpack.c.l.b16 %v1653
    %v1786 = vunpack.c.l.b16 %v1654
    %v1787 = vunpack.c.l.b16 %v1655
    %v1788 = vunpack.c.l.b16 %v1656
    %v1789 = vpack.c.b16 %v1726, %v1725
    %v1790 = vpack.c.b16 %v1728, %v1727
    %v1791 = vpack.c.b16 %v1730, %v1729
    %v1792 = vpack.c.b16 %v1732, %v1731
    %v1793 = vpack.c.b16 %v1734, %v1733
    %v1794 = vpack.c.b16 %v1736, %v1735
    %v1795 = vpack.c.b16 %v1738, %v1737
    %v1796 = vpack.c.b16 %v1740, %v1739
    %v1797 = vpack.c.b16 %v1742, %v1741
    %v1798 = vpack.c.b16 %v1744, %v1743
    %v1799 = vpack.c.b16 %v1746, %v1745
    %v1800 = vpack.c.b16 %v1748, %v1747
    %v1801 = vpack.c.b16 %v1750, %v1749
    %v1802 = vpack.c.b16 %v1752, %v1751
    %v1803 = vpack.c.b16 %v1754, %v1753
    %v1804 = vpack.c.b16 %v1756, %v1755
    %v1805 = vpack.c.b16 %v1758, %v1757
    %v1806 = vpack.c.b16 %v1760, %v1759
    %v1807 = vpack.c.b16 %v1762, %v1761
    %v1808 = vpack.c.b16 %v1764, %v1763
    %v1809 = vpack.c.b16 %v1766, %v1765
    %v1810 = vpack.c.b16 %v1768, %v1767
    %v1811 = vpack.c.b16 %v1770, %v1769
    %v1812 = vpack.c.b16 %v1772, %v1771
    %v1813 = vpack.c.b16 %v1774, %v1773
    %v1814 = vpack.c.b16 %v1776, %v1775
    %v1815 = vpack.c.b16 %v1778, %v1777
    %v1816 = vpack.c.b16 %v1780, %v1779
    %v1817 = vpack.c.b16 %v1782, %v1781
    %v1818 = vpack.c.b16 %v1784, %v1783
    %v1819 = vpack.c.b16 %v1786, %v1785
    %v1820 = vpack.c.b16 %v1788, %v1787
    %1853 = vmatpush.bf16.msra.mxu0 %v1796
    %1854 = vmatpush.bf16.msra.mxu0 %v1795
    %1855 = vmatpush.bf16.msra.mxu0 %v1794
    %1856 = vmatpush.bf16.msra.mxu0 %v1793
    %1857 = vmatpush.bf16.msra.mxu0 %v1792
    %1858 = vmatpush.bf16.msra.mxu0 %v1791
    %1859 = vmatpush.bf16.msra.mxu0 %v1790
    %1860 = vmatpush.bf16.msra.mxu0 %v1789
    %1861 = vmatmul.bf16.gmra.mxu0 %v1529
    %v1862 = vpop.f32.mrf.mxu0
    %v1863 = vadd.f32 %v1659, %v1862
    %v1864 = vpop.f32.mrf.mxu0
    %v1865 = vadd.f32 %v1659, %v1864
    %1866 = vmatmul.bf16.gmra.mxu0 %v1533
    %v1867 = vpop.f32.mrf.mxu0
    %v1868 = vadd.f32 %v1659, %v1867
    %v1869 = vpop.f32.mrf.mxu0
    %v1870 = vadd.f32 %v1659, %v1869
    %1871 = vmatmul.bf16.gmra.mxu0 %v1537
    %v1872 = vpop.f32.mrf.mxu0
    %v1873 = vadd.f32 %v1659, %v1872
    %v1874 = vpop.f32.mrf.mxu0
    %v1875 = vadd.f32 %v1659, %v1874
    %1876 = vmatmul.bf16.gmra.mxu0 %v1541
    %v1877 = vpop.f32.mrf.mxu0
    %v1878 = vadd.f32 %v1659, %v1877
    %v1879 = vpop.f32.mrf.mxu0
    %v1880 = vadd.f32 %v1659, %v1879
    %1881 = vmatmul.bf16.gmra.mxu0 %v1545
    %v1882 = vpop.f32.mrf.mxu0
    %v1883 = vadd.f32 %v1659, %v1882
    %v1884 = vpop.f32.mrf.mxu0
    %v1885 = vadd.f32 %v1659, %v1884
    %1886 = vmatmul.bf16.gmra.mxu0 %v1549
    %v1887 = vpop.f32.mrf.mxu0
    %v1888 = vadd.f32 %v1659, %v1887
    %v1889 = vpop.f32.mrf.mxu0
    %v1890 = vadd.f32 %v1659, %v1889
    %1891 = vmatmul.bf16.gmra.mxu0 %v1553
    %v1892 = vpop.f32.mrf.mxu0
    %v1893 = vadd.f32 %v1659, %v1892
    %v1894 = vpop.f32.mrf.mxu0
    %v1895 = vadd.f32 %v1659, %v1894
    %1896 = vmatmul.bf16.gmra.mxu0 %v1557
    %v1897 = vpop.f32.mrf.mxu0
    %v1898 = vadd.f32 %v1659, %v1897
    %v1899 = vpop.f32.mrf.mxu0
    %v1900 = vadd.f32 %v1659, %v1899
    %1901 = vmatmul.bf16.gmra.mxu0 %v1561
    %v1902 = vpop.f32.mrf.mxu0
    %v1903 = vadd.f32 %v1659, %v1902
    %v1904 = vpop.f32.mrf.mxu0
    %v1905 = vadd.f32 %v1659, %v1904
    %1906 = vmatmul.bf16.gmra.mxu0 %v1565
    %v1907 = vpop.f32.mrf.mxu0
    %v1908 = vadd.f32 %v1659, %v1907
    %v1909 = vpop.f32.mrf.mxu0
    %v1910 = vadd.f32 %v1659, %v1909
    %1911 = vmatmul.bf16.gmra.mxu0 %v1569
    %v1912 = vpop.f32.mrf.mxu0
    %v1913 = vadd.f32 %v1659, %v1912
    %v1914 = vpop.f32.mrf.mxu0
    %v1915 = vadd.f32 %v1659, %v1914
    %1916 = vmatmul.bf16.gmra.mxu0 %v1573
    %v1917 = vpop.f32.mrf.mxu0
    %v1918 = vadd.f32 %v1659, %v1917
    %v1919 = vpop.f32.mrf.mxu0
    %v1920 = vadd.f32 %v1659, %v1919
    %1921 = vmatmul.bf16.gmra.mxu0 %v1577
    %v1922 = vpop.f32.mrf.mxu0
    %v1923 = vadd.f32 %v1659, %v1922
    %v1924 = vpop.f32.mrf.mxu0
    %v1925 = vadd.f32 %v1659, %v1924
    %1926 = vmatmul.bf16.gmra.mxu0 %v1581
    %v1927 = vpop.f32.mrf.mxu0
    %v1928 = vadd.f32 %v1659, %v1927
    %v1929 = vpop.f32.mrf.mxu0
    %v1930 = vadd.f32 %v1659, %v1929
    %1931 = vmatmul.bf16.gmra.mxu0 %v1585
    %v1932 = vpop.f32.mrf.mxu0
    %v1933 = vadd.f32 %v1659, %v1932
    %v1934 = vpop.f32.mrf.mxu0
    %v1935 = vadd.f32 %v1659, %v1934
    %1936 = vmatmul.bf16.gmra.mxu0 %v1589
    %v1937 = vpop.f32.mrf.mxu0
    %v1938 = vadd.f32 %v1659, %v1937
    %v1939 = vpop.f32.mrf.mxu0
    %v1940 = vadd.f32 %v1659, %v1939
    %1941 = vdwg.mxu0
    %1942 = vmatpush.bf16.msra.mxu0 %v1804
    %1943 = vmatpush.bf16.msra.mxu0 %v1803
    %1944 = vmatpush.bf16.msra.mxu0 %v1802
    %1945 = vmatpush.bf16.msra.mxu0 %v1801
    %1946 = vmatpush.bf16.msra.mxu0 %v1800
    %1947 = vmatpush.bf16.msra.mxu0 %v1799
    %1948 = vmatpush.bf16.msra.mxu0 %v1798
    %1949 = vmatpush.bf16.msra.mxu0 %v1797
    %1950 = vmatmul.bf16.gmra.mxu0 %v1530
    %v1951 = vpop.f32.mrf.mxu0
    %v1952 = vadd.f32 %v1863, %v1951
    %v1953 = vpop.f32.mrf.mxu0
    %v1954 = vadd.f32 %v1865, %v1953
    %1955 = vmatmul.bf16.gmra.mxu0 %v1534
    %v1956 = vpop.f32.mrf.mxu0
    %v1957 = vadd.f32 %v1868, %v1956
    %v1958 = vpop.f32.mrf.mxu0
    %v1959 = vadd.f32 %v1870, %v1958
    %1960 = vmatmul.bf16.gmra.mxu0 %v1538
    %v1961 = vpop.f32.mrf.mxu0
    %v1962 = vadd.f32 %v1873, %v1961
    %v1963 = vpop.f32.mrf.mxu0
    %v1964 = vadd.f32 %v1875, %v1963
    %1965 = vmatmul.bf16.gmra.mxu0 %v1542
    %v1966 = vpop.f32.mrf.mxu0
    %v1967 = vadd.f32 %v1878, %v1966
    %v1968 = vpop.f32.mrf.mxu0
    %v1969 = vadd.f32 %v1880, %v1968
    %1970 = vmatmul.bf16.gmra.mxu0 %v1546
    %v1971 = vpop.f32.mrf.mxu0
    %v1972 = vadd.f32 %v1883, %v1971
    %v1973 = vpop.f32.mrf.mxu0
    %v1974 = vadd.f32 %v1885, %v1973
    %1975 = vmatmul.bf16.gmra.mxu0 %v1550
    %v1976 = vpop.f32.mrf.mxu0
    %v1977 = vadd.f32 %v1888, %v1976
    %v1978 = vpop.f32.mrf.mxu0
    %v1979 = vadd.f32 %v1890, %v1978
    %1980 = vmatmul.bf16.gmra.mxu0 %v1554
    %v1981 = vpop.f32.mrf.mxu0
    %v1982 = vadd.f32 %v1893, %v1981
    %v1983 = vpop.f32.mrf.mxu0
    %v1984 = vadd.f32 %v1895, %v1983
    %1985 = vmatmul.bf16.gmra.mxu0 %v1558
    %v1986 = vpop.f32.mrf.mxu0
    %v1987 = vadd.f32 %v1898, %v1986
    %v1988 = vpop.f32.mrf.mxu0
    %v1989 = vadd.f32 %v1900, %v1988
    %1990 = vmatmul.bf16.gmra.mxu0 %v1562
    %v1991 = vpop.f32.mrf.mxu0
    %v1992 = vadd.f32 %v1903, %v1991
    %v1993 = vpop.f32.mrf.mxu0
    %v1994 = vadd.f32 %v1905, %v1993
    %1995 = vmatmul.bf16.gmra.mxu0 %v1566
    %v1996 = vpop.f32.mrf.mxu0
    %v1997 = vadd.f32 %v1908, %v1996
    %v1998 = vpop.f32.mrf.mxu0
    %v1999 = vadd.f32 %v1910, %v1998
    %2000 = vmatmul.bf16.gmra.mxu0 %v1570
    %v2001 = vpop.f32.mrf.mxu0
    %v2002 = vadd.f32 %v1913, %v2001
    %v2003 = vpop.f32.mrf.mxu0
    %v2004 = vadd.f32 %v1915, %v2003
    %2005 = vmatmul.bf16.gmra.mxu0 %v1574
    %v2006 = vpop.f32.mrf.mxu0
    %v2007 = vadd.f32 %v1918, %v2006
    %v2008 = vpop.f32.mrf.mxu0
    %v2009 = vadd.f32 %v1920, %v2008
    %2010 = vmatmul.bf16.gmra.mxu0 %v1578
    %v2011 = vpop.f32.mrf.mxu0
    %v2012 = vadd.f32 %v1923, %v2011
    %v2013 = vpop.f32.mrf.mxu0
    %v2014 = vadd.f32 %v1925, %v2013
    %2015 = vmatmul.bf16.gmra.mxu0 %v1582
    %v2016 = vpop.f32.mrf.mxu0
    %v2017 = vadd.f32 %v1928, %v2016
    %v2018 = vpop.f32.mrf.mxu0
    %v2019 = vadd.f32 %v1930, %v2018
    %2020 = vmatmul.bf16.gmra.mxu0 %v1586
    %v2021 = vpop.f32.mrf.mxu0
    %v2022 = vadd.f32 %v1933, %v2021
    %v2023 = vpop.f32.mrf.mxu0
    %v2024 = vadd.f32 %v1935, %v2023
    %2025 = vmatmul.bf16.gmra.mxu0 %v1590
    %v2026 = vpop.f32.mrf.mxu0
    %v2027 = vadd.f32 %v1938, %v2026
    %v2028 = vpop.f32.mrf.mxu0
    %v2029 = vadd.f32 %v1940, %v2028
    %2030 = vdwg.mxu0
    %2031 = vmatpush.bf16.msra.mxu0 %v1812
    %2032 = vmatpush.bf16.msra.mxu0 %v1811
    %2033 = vmatpush.bf16.msra.mxu0 %v1810
    %2034 = vmatpush.bf16.msra.mxu0 %v1809
    %2035 = vmatpush.bf16.msra.mxu0 %v1808
    %2036 = vmatpush.bf16.msra.mxu0 %v1807
    %2037 = vmatpush.bf16.msra.mxu0 %v1806
    %2038 = vmatpush.bf16.msra.mxu0 %v1805
    %2039 = vmatmul.bf16.gmra.mxu0 %v1531
    %v2040 = vpop.f32.mrf.mxu0
    %v2041 = vadd.f32 %v1952, %v2040
    %v2042 = vpop.f32.mrf.mxu0
    %v2043 = vadd.f32 %v1954, %v2042
    %2044 = vmatmul.bf16.gmra.mxu0 %v1535
    %v2045 = vpop.f32.mrf.mxu0
    %v2046 = vadd.f32 %v1957, %v2045
    %v2047 = vpop.f32.mrf.mxu0
    %v2048 = vadd.f32 %v1959, %v2047
    %2049 = vmatmul.bf16.gmra.mxu0 %v1539
    %v2050 = vpop.f32.mrf.mxu0
    %v2051 = vadd.f32 %v1962, %v2050
    %v2052 = vpop.f32.mrf.mxu0
    %v2053 = vadd.f32 %v1964, %v2052
    %2054 = vmatmul.bf16.gmra.mxu0 %v1543
    %v2055 = vpop.f32.mrf.mxu0
    %v2056 = vadd.f32 %v1967, %v2055
    %v2057 = vpop.f32.mrf.mxu0
    %v2058 = vadd.f32 %v1969, %v2057
    %2059 = vmatmul.bf16.gmra.mxu0 %v1547
    %v2060 = vpop.f32.mrf.mxu0
    %v2061 = vadd.f32 %v1972, %v2060
    %v2062 = vpop.f32.mrf.mxu0
    %v2063 = vadd.f32 %v1974, %v2062
    %2064 = vmatmul.bf16.gmra.mxu0 %v1551
    %v2065 = vpop.f32.mrf.mxu0
    %v2066 = vadd.f32 %v1977, %v2065
    %v2067 = vpop.f32.mrf.mxu0
    %v2068 = vadd.f32 %v1979, %v2067
    %2069 = vmatmul.bf16.gmra.mxu0 %v1555
    %v2070 = vpop.f32.mrf.mxu0
    %v2071 = vadd.f32 %v1982, %v2070
    %v2072 = vpop.f32.mrf.mxu0
    %v2073 = vadd.f32 %v1984, %v2072
    %2074 = vmatmul.bf16.gmra.mxu0 %v1559
    %v2075 = vpop.f32.mrf.mxu0
    %v2076 = vadd.f32 %v1987, %v2075
    %v2077 = vpop.f32.mrf.mxu0
    %v2078 = vadd.f32 %v1989, %v2077
    %2079 = vmatmul.bf16.gmra.mxu0 %v1563
    %v2080 = vpop.f32.mrf.mxu0
    %v2081 = vadd.f32 %v1992, %v2080
    %v2082 = vpop.f32.mrf.mxu0
    %v2083 = vadd.f32 %v1994, %v2082
    %2084 = vmatmul.bf16.gmra.mxu0 %v1567
    %v2085 = vpop.f32.mrf.mxu0
    %v2086 = vadd.f32 %v1997, %v2085
    %v2087 = vpop.f32.mrf.mxu0
    %v2088 = vadd.f32 %v1999, %v2087
    %2089 = vmatmul.bf16.gmra.mxu0 %v1571
    %v2090 = vpop.f32.mrf.mxu0
    %v2091 = vadd.f32 %v2002, %v2090
    %v2092 = vpop.f32.mrf.mxu0
    %v2093 = vadd.f32 %v2004, %v2092
    %2094 = vmatmul.bf16.gmra.mxu0 %v1575
    %v2095 = vpop.f32.mrf.mxu0
    %v2096 = vadd.f32 %v2007, %v2095
    %v2097 = vpop.f32.mrf.mxu0
    %v2098 = vadd.f32 %v2009, %v2097
    %2099 = vmatmul.bf16.gmra.mxu0 %v1579
    %v2100 = vpop.f32.mrf.mxu0
    %v2101 = vadd.f32 %v2012, %v2100
    %v2102 = vpop.f32.mrf.mxu0
    %v2103 = vadd.f32 %v2014, %v2102
    %2104 = vmatmul.bf16.gmra.mxu0 %v1583
    %v2105 = vpop.f32.mrf.mxu0
    %v2106 = vadd.f32 %v2017, %v2105
    %v2107 = vpop.f32.mrf.mxu0
    %v2108 = vadd.f32 %v2019, %v2107
    %2109 = vmatmul.bf16.gmra.mxu0 %v1587
    %v2110 = vpop.f32.mrf.mxu0
    %v2111 = vadd.f32 %v2022, %v2110
    %v2112 = vpop.f32.mrf.mxu0
    %v2113 = vadd.f32 %v2024, %v2112
    %2114 = vmatmul.bf16.gmra.mxu0 %v1591
    %v2115 = vpop.f32.mrf.mxu0
    %v2116 = vadd.f32 %v2027, %v2115
    %v2117 = vpop.f32.mrf.mxu0
    %v2118 = vadd.f32 %v2029, %v2117
    %2119 = vdwg.mxu0
    %2120 = vmatpush.bf16.msra.mxu0 %v1820
    %2121 = vmatpush.bf16.msra.mxu0 %v1819
    %2122 = vmatpush.bf16.msra.mxu0 %v1818
    %2123 = vmatpush.bf16.msra.mxu0 %v1817
    %2124 = vmatpush.bf16.msra.mxu0 %v1816
    %2125 = vmatpush.bf16.msra.mxu0 %v1815
    %2126 = vmatpush.bf16.msra.mxu0 %v1814
    %2127 = vmatpush.bf16.msra.mxu0 %v1813
    %2128 = vmatmul.bf16.gmra.mxu0 %v1532
    %v2129 = vpop.f32.mrf.mxu0
    %v2130 = vadd.f32 %v2041, %v2129
    %v2131 = vpop.f32.mrf.mxu0
    %v2132 = vadd.f32 %v2043, %v2131
    %2133 = vmatmul.bf16.gmra.mxu0 %v1536
    %v2134 = vpop.f32.mrf.mxu0
    %v2135 = vadd.f32 %v2046, %v2134
    %v2136 = vpop.f32.mrf.mxu0
    %v2137 = vadd.f32 %v2048, %v2136
    %2138 = vmatmul.bf16.gmra.mxu0 %v1540
    %v2139 = vpop.f32.mrf.mxu0
    %v2140 = vadd.f32 %v2051, %v2139
    %v2141 = vpop.f32.mrf.mxu0
    %v2142 = vadd.f32 %v2053, %v2141
    %2143 = vmatmul.bf16.gmra.mxu0 %v1544
    %v2144 = vpop.f32.mrf.mxu0
    %v2145 = vadd.f32 %v2056, %v2144
    %v2146 = vpop.f32.mrf.mxu0
    %v2147 = vadd.f32 %v2058, %v2146
    %2148 = vmatmul.bf16.gmra.mxu0 %v1548
    %v2149 = vpop.f32.mrf.mxu0
    %v2150 = vadd.f32 %v2061, %v2149
    %v2151 = vpop.f32.mrf.mxu0
    %v2152 = vadd.f32 %v2063, %v2151
    %2153 = vmatmul.bf16.gmra.mxu0 %v1552
    %v2154 = vpop.f32.mrf.mxu0
    %v2155 = vadd.f32 %v2066, %v2154
    %v2156 = vpop.f32.mrf.mxu0
    %v2157 = vadd.f32 %v2068, %v2156
    %2158 = vmatmul.bf16.gmra.mxu0 %v1556
    %v2159 = vpop.f32.mrf.mxu0
    %v2160 = vadd.f32 %v2071, %v2159
    %v2161 = vpop.f32.mrf.mxu0
    %v2162 = vadd.f32 %v2073, %v2161
    %2163 = vmatmul.bf16.gmra.mxu0 %v1560
    %v2164 = vpop.f32.mrf.mxu0
    %v2165 = vadd.f32 %v2076, %v2164
    %v2166 = vpop.f32.mrf.mxu0
    %v2167 = vadd.f32 %v2078, %v2166
    %2168 = vmatmul.bf16.gmra.mxu0 %v1564
    %v2169 = vpop.f32.mrf.mxu0
    %v2170 = vadd.f32 %v2081, %v2169
    %v2171 = vpop.f32.mrf.mxu0
    %v2172 = vadd.f32 %v2083, %v2171
    %2173 = vmatmul.bf16.gmra.mxu0 %v1568
    %v2174 = vpop.f32.mrf.mxu0
    %v2175 = vadd.f32 %v2086, %v2174
    %v2176 = vpop.f32.mrf.mxu0
    %v2177 = vadd.f32 %v2088, %v2176
    %2178 = vmatmul.bf16.gmra.mxu0 %v1572
    %v2179 = vpop.f32.mrf.mxu0
    %v2180 = vadd.f32 %v2091, %v2179
    %v2181 = vpop.f32.mrf.mxu0
    %v2182 = vadd.f32 %v2093, %v2181
    %2183 = vmatmul.bf16.gmra.mxu0 %v1576
    %v2184 = vpop.f32.mrf.mxu0
    %v2185 = vadd.f32 %v2096, %v2184
    %v2186 = vpop.f32.mrf.mxu0
    %v2187 = vadd.f32 %v2098, %v2186
    %2188 = vmatmul.bf16.gmra.mxu0 %v1580
    %v2189 = vpop.f32.mrf.mxu0
    %v2190 = vadd.f32 %v2101, %v2189
    %v2191 = vpop.f32.mrf.mxu0
    %v2192 = vadd.f32 %v2103, %v2191
    %2193 = vmatmul.bf16.gmra.mxu0 %v1584
    %v2194 = vpop.f32.mrf.mxu0
    %v2195 = vadd.f32 %v2106, %v2194
    %v2196 = vpop.f32.mrf.mxu0
    %v2197 = vadd.f32 %v2108, %v2196
    %2198 = vmatmul.bf16.gmra.mxu0 %v1588
    %v2199 = vpop.f32.mrf.mxu0
    %v2200 = vadd.f32 %v2111, %v2199
    %v2201 = vpop.f32.mrf.mxu0
    %v2202 = vadd.f32 %v2113, %v2201
    %2203 = vmatmul.bf16.gmra.mxu0 %v1592
    %v2204 = vpop.f32.mrf.mxu0
    %v2205 = vadd.f32 %v2116, %v2204
    %v2206 = vpop.f32.mrf.mxu0
    %v2207 = vadd.f32 %v2118, %v2206
    %2208 = vdwg.mxu0
    %v2209 = vmax.f32 %v2130, 0.0
    %v2210 = vmax.f32 %v2132, 0.0
    %v2211 = vmax.f32 %v2135, 0.0
    %v2212 = vmax.f32 %v2137, 0.0
    %v2213 = vmax.f32 %v2140, 0.0
    %v2214 = vmax.f32 %v2142, 0.0
    %v2215 = vmax.f32 %v2145, 0.0
    %v2216 = vmax.f32 %v2147, 0.0
    %v2217 = vmax.f32 %v2150, 0.0
    %v2218 = vmax.f32 %v2152, 0.0
    %v2219 = vmax.f32 %v2155, 0.0
    %v2220 = vmax.f32 %v2157, 0.0
    %v2221 = vmax.f32 %v2160, 0.0
    %v2222 = vmax.f32 %v2162, 0.0
    %v2223 = vmax.f32 %v2165, 0.0
    %v2224 = vmax.f32 %v2167, 0.0
    %v2225 = vmax.f32 %v2170, 0.0
    %v2226 = vmax.f32 %v2172, 0.0
    %v2227 = vmax.f32 %v2175, 0.0
    %v2228 = vmax.f32 %v2177, 0.0
    %v2229 = vmax.f32 %v2180, 0.0
    %v2230 = vmax.f32 %v2182, 0.0
    %v2231 = vmax.f32 %v2185, 0.0
    %v2232 = vmax.f32 %v2187, 0.0
    %v2233 = vmax.f32 %v2190, 0.0
    %v2234 = vmax.f32 %v2192, 0.0
    %v2235 = vmax.f32 %v2195, 0.0
    %v2236 = vmax.f32 %v2197, 0.0
    %v2237 = vmax.f32 %v2200, 0.0
    %v2238 = vmax.f32 %v2202, 0.0
    %v2239 = vmax.f32 %v2205, 0.0
    %v2240 = vmax.f32 %v2207, 0.0
    %v2241 = vpack.c.bf16 %v2210, %v2209
    %v2242 = vpack.c.bf16 %v2212, %v2211
    %v2243 = vpack.c.bf16 %v2214, %v2213
    %v2244 = vpack.c.bf16 %v2216, %v2215
    %v2245 = vpack.c.bf16 %v2218, %v2217
    %v2246 = vpack.c.bf16 %v2220, %v2219
    %v2247 = vpack.c.bf16 %v2222, %v2221
    %v2248 = vpack.c.bf16 %v2224, %v2223
    %v2249 = vpack.c.bf16 %v2226, %v2225
    %v2250 = vpack.c.bf16 %v2228, %v2227
    %v2251 = vpack.c.bf16 %v2230, %v2229
    %v2252 = vpack.c.bf16 %v2232, %v2231
    %v2253 = vpack.c.bf16 %v2234, %v2233
    %v2254 = vpack.c.bf16 %v2236, %v2235
    %v2255 = vpack.c.bf16 %v2238, %v2237
    %v2256 = vpack.c.bf16 %v2240, %v2239
    %v2257 = vld [vmem:[#allocation10] sm:$0xf]
    %v2258 = vld [vmem:[#allocation10 + $0x4] sm:$0xf]
    %v2259 = vld [vmem:[#allocation10 + $0x8] sm:$0xf]
    %v2260 = vld [vmem:[#allocation10 + $0xc] sm:$0xf]
    %v2261 = vld [vmem:[#allocation10 + $0x10] sm:$0xf]
    %v2262 = vld [vmem:[#allocation10 + $0x14] sm:$0xf]
    %v2263 = vld [vmem:[#allocation10 + $0x18] sm:$0xf]
    %v2264 = vld [vmem:[#allocation10 + $0x1c] sm:$0xf]
    %v2265 = vld [vmem:[#allocation10 + $0x20] sm:$0xf]
    %v2266 = vld [vmem:[#allocation10 + $0x24] sm:$0xf]
    %v2267 = vld [vmem:[#allocation10 + $0x28] sm:$0xf]
    %v2268 = vld [vmem:[#allocation10 + $0x2c] sm:$0xf]
    %v2269 = vld [vmem:[#allocation10 + $0x30] sm:$0xf]
    %v2270 = vld [vmem:[#allocation10 + $0x34] sm:$0xf]
    %v2271 = vld [vmem:[#allocation10 + $0x38] sm:$0xf]
    %v2272 = vld [vmem:[#allocation10 + $0x3c] sm:$0xf]
    %v2273 = vld [vmem:[%s6] sm:$0x1]
    %v2275 = vperm.slane %v2273, 0
    %v2293 = vunpack.c.l.b16 %v2257
    %v2294 = vunpack.c.l.b16 %v2258
    %v2295 = vunpack.c.l.b16 %v2259
    %v2296 = vunpack.c.l.b16 %v2260
    %v2297 = vunpack.c.l.b16 %v2261
    %v2298 = vunpack.c.l.b16 %v2262
    %v2299 = vunpack.c.l.b16 %v2263
    %v2300 = vunpack.c.l.b16 %v2264
    %v2301 = vunpack.c.l.b16 %v2265
    %v2302 = vunpack.c.l.b16 %v2266
    %v2303 = vunpack.c.l.b16 %v2267
    %v2304 = vunpack.c.l.b16 %v2268
    %v2305 = vunpack.c.l.b16 %v2269
    %v2306 = vunpack.c.l.b16 %v2270
    %v2307 = vunpack.c.l.b16 %v2271
    %v2308 = vunpack.c.l.b16 %v2272
    %v2309 = vpack.c.b16 %v2294, %v2293
    %v2310 = vpack.c.b16 %v2296, %v2295
    %v2311 = vpack.c.b16 %v2298, %v2297
    %v2312 = vpack.c.b16 %v2300, %v2299
    %v2313 = vpack.c.b16 %v2302, %v2301
    %v2314 = vpack.c.b16 %v2304, %v2303
    %v2315 = vpack.c.b16 %v2306, %v2305
    %v2316 = vpack.c.b16 %v2308, %v2307
    %2325 = vmatpush.bf16.msra.mxu0 %v2316
    %2326 = vmatpush.bf16.msra.mxu0 %v2315
    %2327 = vmatpush.bf16.msra.mxu0 %v2314
    %2328 = vmatpush.bf16.msra.mxu0 %v2313
    %2329 = vmatpush.bf16.msra.mxu0 %v2312
    %2330 = vmatpush.bf16.msra.mxu0 %v2311
    %2331 = vmatpush.bf16.msra.mxu0 %v2310
    %2332 = vmatpush.bf16.msra.mxu0 %v2309
    %2333 = vmatmul.bf16.gmra.mxu0 %v2241
    %v2334 = vpop.f32.mrf.mxu0
    %v2335 = vadd.f32 %v2275, %v2334
    %v2336 = vpop.f32.mrf.mxu0
    %v2337 = vadd.f32 %v2275, %v2336
    %2338 = vmatmul.bf16.gmra.mxu0 %v2242
    %v2339 = vpop.f32.mrf.mxu0
    %v2340 = vadd.f32 %v2275, %v2339
    %v2341 = vpop.f32.mrf.mxu0
    %v2342 = vadd.f32 %v2275, %v2341
    %2343 = vmatmul.bf16.gmra.mxu0 %v2243
    %v2344 = vpop.f32.mrf.mxu0
    %v2345 = vadd.f32 %v2275, %v2344
    %v2346 = vpop.f32.mrf.mxu0
    %v2347 = vadd.f32 %v2275, %v2346
    %2348 = vmatmul.bf16.gmra.mxu0 %v2244
    %v2349 = vpop.f32.mrf.mxu0
    %v2350 = vadd.f32 %v2275, %v2349
    %v2351 = vpop.f32.mrf.mxu0
    %v2352 = vadd.f32 %v2275, %v2351
    %2353 = vmatmul.bf16.gmra.mxu0 %v2245
    %v2354 = vpop.f32.mrf.mxu0
    %v2355 = vadd.f32 %v2275, %v2354
    %v2356 = vpop.f32.mrf.mxu0
    %v2357 = vadd.f32 %v2275, %v2356
    %2358 = vmatmul.bf16.gmra.mxu0 %v2246
    %v2359 = vpop.f32.mrf.mxu0
    %v2360 = vadd.f32 %v2275, %v2359
    %v2361 = vpop.f32.mrf.mxu0
    %v2362 = vadd.f32 %v2275, %v2361
    %2363 = vmatmul.bf16.gmra.mxu0 %v2247
    %v2364 = vpop.f32.mrf.mxu0
    %v2365 = vadd.f32 %v2275, %v2364
    %v2366 = vpop.f32.mrf.mxu0
    %v2367 = vadd.f32 %v2275, %v2366
    %2368 = vmatmul.bf16.gmra.mxu0 %v2248
    %v2369 = vpop.f32.mrf.mxu0
    %v2370 = vadd.f32 %v2275, %v2369
    %v2371 = vpop.f32.mrf.mxu0
    %v2372 = vadd.f32 %v2275, %v2371
    %2373 = vmatmul.bf16.gmra.mxu0 %v2249
    %v2374 = vpop.f32.mrf.mxu0
    %v2375 = vadd.f32 %v2275, %v2374
    %v2376 = vpop.f32.mrf.mxu0
    %v2377 = vadd.f32 %v2275, %v2376
    %2378 = vmatmul.bf16.gmra.mxu0 %v2250
    %v2379 = vpop.f32.mrf.mxu0
    %v2380 = vadd.f32 %v2275, %v2379
    %v2381 = vpop.f32.mrf.mxu0
    %v2382 = vadd.f32 %v2275, %v2381
    %2383 = vmatmul.bf16.gmra.mxu0 %v2251
    %v2384 = vpop.f32.mrf.mxu0
    %v2385 = vadd.f32 %v2275, %v2384
    %v2386 = vpop.f32.mrf.mxu0
    %v2387 = vadd.f32 %v2275, %v2386
    %2388 = vmatmul.bf16.gmra.mxu0 %v2252
    %v2389 = vpop.f32.mrf.mxu0
    %v2390 = vadd.f32 %v2275, %v2389
    %v2391 = vpop.f32.mrf.mxu0
    %v2392 = vadd.f32 %v2275, %v2391
    %2393 = vmatmul.bf16.gmra.mxu0 %v2253
    %v2394 = vpop.f32.mrf.mxu0
    %v2395 = vadd.f32 %v2275, %v2394
    %v2396 = vpop.f32.mrf.mxu0
    %v2397 = vadd.f32 %v2275, %v2396
    %2398 = vmatmul.bf16.gmra.mxu0 %v2254
    %v2399 = vpop.f32.mrf.mxu0
    %v2400 = vadd.f32 %v2275, %v2399
    %v2401 = vpop.f32.mrf.mxu0
    %v2402 = vadd.f32 %v2275, %v2401
    %2403 = vmatmul.bf16.gmra.mxu0 %v2255
    %v2404 = vpop.f32.mrf.mxu0
    %v2405 = vadd.f32 %v2275, %v2404
    %v2406 = vpop.f32.mrf.mxu0
    %v2407 = vadd.f32 %v2275, %v2406
    %2408 = vmatmul.bf16.gmra.mxu0 %v2256
    %v2409 = vpop.f32.mrf.mxu0
    %v2410 = vadd.f32 %v2275, %v2409
    %v2411 = vpop.f32.mrf.mxu0
    %v2412 = vadd.f32 %v2275, %v2411
    %2413 = vdwg.mxu0
    %v2414 = vpack.c.bf16 %v2335, %v2335
    %v2415 = vpack.c.bf16 %v2337, %v2337
    %v2416 = vpack.c.bf16 %v2340, %v2340
    %v2417 = vpack.c.bf16 %v2342, %v2342
    %v2418 = vpack.c.bf16 %v2345, %v2345
    %v2419 = vpack.c.bf16 %v2347, %v2347
    %v2420 = vpack.c.bf16 %v2350, %v2350
    %v2421 = vpack.c.bf16 %v2352, %v2352
    %v2422 = vpack.c.bf16 %v2355, %v2355
    %v2423 = vpack.c.bf16 %v2357, %v2357
    %v2424 = vpack.c.bf16 %v2360, %v2360
    %v2425 = vpack.c.bf16 %v2362, %v2362
    %v2426 = vpack.c.bf16 %v2365, %v2365
    %v2427 = vpack.c.bf16 %v2367, %v2367
    %v2428 = vpack.c.bf16 %v2370, %v2370
    %v2429 = vpack.c.bf16 %v2372, %v2372
    %v2430 = vpack.c.bf16 %v2375, %v2375
    %v2431 = vpack.c.bf16 %v2377, %v2377
    %v2432 = vpack.c.bf16 %v2380, %v2380
    %v2433 = vpack.c.bf16 %v2382, %v2382
    %v2434 = vpack.c.bf16 %v2385, %v2385
    %v2435 = vpack.c.bf16 %v2387, %v2387
    %v2436 = vpack.c.bf16 %v2390, %v2390
    %v2437 = vpack.c.bf16 %v2392, %v2392
    %v2438 = vpack.c.bf16 %v2395, %v2395
    %v2439 = vpack.c.bf16 %v2397, %v2397
    %v2440 = vpack.c.bf16 %v2400, %v2400
    %v2441 = vpack.c.bf16 %v2402, %v2402
    %v2442 = vpack.c.bf16 %v2405, %v2405
    %v2443 = vpack.c.bf16 %v2407, %v2407
    %v2444 = vpack.c.bf16 %v2410, %v2410
    %v2445 = vpack.c.bf16 %v2412, %v2412
    %2446 = vst [vmem:[#allocation11] sm:$0xf] %v2414
    %2447 = vst [vmem:[#allocation11 + $0x4] sm:$0xf] %v2415
    %2448 = vst [vmem:[#allocation11 + $0x8] sm:$0xf] %v2416
    %2449 = vst [vmem:[#allocation11 + $0xc] sm:$0xf] %v2417
    %2450 = vst [vmem:[#allocation11 + $0x10] sm:$0xf] %v2418
    %2451 = vst [vmem:[#allocation11 + $0x14] sm:$0xf] %v2419
    %2452 = vst [vmem:[#allocation11 + $0x18] sm:$0xf] %v2420
    %2453 = vst [vmem:[#allocation11 + $0x1c] sm:$0xf] %v2421
    %2454 = vst [vmem:[#allocation11 + $0x20] sm:$0xf] %v2422
    %2455 = vst [vmem:[#allocation11 + $0x24] sm:$0xf] %v2423
    %2456 = vst [vmem:[#allocation11 + $0x28] sm:$0xf] %v2424
    %2457 = vst [vmem:[#allocation11 + $0x2c] sm:$0xf] %v2425
    %2458 = vst [vmem:[#allocation11 + $0x30] sm:$0xf] %v2426
    %2459 = vst [vmem:[#allocation11 + $0x34] sm:$0xf] %v2427
    %2460 = vst [vmem:[#allocation11 + $0x38] sm:$0xf] %v2428
    %2461 = vst [vmem:[#allocation11 + $0x3c] sm:$0xf] %v2429
    %2462 = vst [vmem:[#allocation11 + $0x40] sm:$0xf] %v2430
    %2463 = vst [vmem:[#allocation11 + $0x44] sm:$0xf] %v2431
    %2464 = vst [vmem:[#allocation11 + $0x48] sm:$0xf] %v2432
    %2465 = vst [vmem:[#allocation11 + $0x4c] sm:$0xf] %v2433
    %2466 = vst [vmem:[#allocation11 + $0x50] sm:$0xf] %v2434
    %2467 = vst [vmem:[#allocation11 + $0x54] sm:$0xf] %v2435
    %2468 = vst [vmem:[#allocation11 + $0x58] sm:$0xf] %v2436
    %2469 = vst [vmem:[#allocation11 + $0x5c] sm:$0xf] %v2437
    %2470 = vst [vmem:[#allocation11 + $0x60] sm:$0xf] %v2438
    %2471 = vst [vmem:[#allocation11 + $0x64] sm:$0xf] %v2439
    %2472 = vst [vmem:[#allocation11 + $0x68] sm:$0xf] %v2440
    %2473 = vst [vmem:[#allocation11 + $0x6c] sm:$0xf] %v2441
    %2474 = vst [vmem:[#allocation11 + $0x70] sm:$0xf] %v2442
    %2475 = vst [vmem:[#allocation11 + $0x74] sm:$0xf] %v2443
    %2476 = vst [vmem:[#allocation11 + $0x78] sm:$0xf] %v2444
    %2477 = vst [vmem:[#allocation11 + $0x7c] sm:$0xf] %v2445
    // Predicated region
    $region50: #{tpu_custom_call.1} parent=1 // pred_check
      _
    $region51: #{tpu_custom_call.1} parent=1 // pred_check_branch
      %2479 = sbr.rel (0) target = $region53
    $region52: #{tpu_custom_call.1} parent=1 // pred_region
      %2481 = vsyncadd [#allocation4], 0
      %s2482 = sshll.u32 [#allocation11], 4
      %s2483 = int_to_ptr.vmem [resolvable:$true] %s2482
      %s2484 = sshll.u32 %s7, 4
      %s2485 = int_to_ptr.hbm [resolvable:$true] %s2484
      %2490 = dma.vmem_to_hbm [thread:$0]  %s2483, 2048, %s2485, [#allocation4], 64, 64, 4
    $region53: #{tpu_custom_call.1} parent=1 // pred_fallthru
      _
    // Predicated region
    $region54: #{tpu_custom_call.1} parent=1 // pred_check
      _
    $region55: #{tpu_custom_call.1} parent=1 // pred_check_branch
      %2492 = sbr.rel (0) target = $region57
    $region56: #{tpu_custom_call.1} parent=1 // pred_region
      %2494 = dma.done [#allocation4], 2048
    $region57: #{tpu_custom_call.1} parent=1 // pred_fallthru
      _
    %2495 = vsyncpa [#allocation3], 1
    %2496 = vsyncpa [#allocation6], 1
    %2497 = vsyncpa [#allocation9], 1
    %2498 = vsyncpa [#allocation4], 1

</llo_original>
